<compile_context>
chip_gen: v5e
topology: v5e:2x2
jax: 0.10.0
libtpu: 0.0.40
codegen_flags: <defaults>
</compile_context>

<pallas_src>
import jax
import jax.numpy as jnp
from jax.experimental import pallas as pl
from jax.experimental.pallas import tpu as pltpu

TILE_B = 512       # large tile amortizes ~0.35 us/grid-step overhead; ~8 MB VMEM worst case
HIDDEN_PAD = 512   # 400 -> 512 (4 * 128 lanes)
OUT_PAD = 128      # 10  -> 128 (lane-dense output, unmasked stores)


def _round_up(x, m):
    return ((x + m - 1) // m) * m


def _cdiv(a, b):
    return -(-a // b)


def _choose_tiling(B):
    """Pick (tile_b, num_tiles). tile_b is a multiple of 16 (bf16 sublane packing);
    batches above 32 rows always get >= 2 grid steps so v7x megacore splits the work."""
    if B <= 32:
        return _round_up(max(B, 1), 16), 1
    num_tiles = max(2, _cdiv(B, TILE_B))
    tile_b = _round_up(_cdiv(B, num_tiles), 16)
    num_tiles = max(2, _cdiv(B, tile_b))
    return tile_b, num_tiles


def prepare_params(params):
    """One-time (model-load) preparation: zero-pad to lane-aligned dims and cast
    matmul operands to bf16. Accepts PyTorch-style biases of shape (N,) or (1, N)."""
    w1, b1, w2, b2, w3, b3 = params
    hp, op = HIDDEN_PAD, OUT_PAD
    d_in, h = w1.shape
    out_dim = w3.shape[1]

    def bias2d(b):
        return jnp.asarray(b, jnp.float32).reshape(1, -1)

    b1, b2, b3 = bias2d(b1), bias2d(b2), bias2d(b3)
    w1p = jnp.zeros((d_in, hp), jnp.bfloat16).at[:, :h].set(w1.astype(jnp.bfloat16))
    b1p = jnp.zeros((1, hp), jnp.float32).at[:, :h].set(b1)
    w2p = jnp.zeros((hp, hp), jnp.bfloat16).at[:h, :h].set(w2.astype(jnp.bfloat16))
    b2p = jnp.zeros((1, hp), jnp.float32).at[:, :h].set(b2)
    w3p = jnp.zeros((hp, op), jnp.bfloat16).at[:h, :out_dim].set(w3.astype(jnp.bfloat16))
    b3p = jnp.zeros((1, op), jnp.float32).at[:, :out_dim].set(b3)
    return (w1p, b1p, w2p, b2p, w3p, b3p), out_dim


def mlp_kernel(x_ref, w1_ref, b1_ref, w2_ref, b2_ref, w3_ref, b3_ref, o_ref):
    # One batch tile: three MXU matmuls (bf16 operands, f32 accumulation) plus
    # VPU bias-add / ReLU. Weights are single-buffered and VMEM-resident.
    x = x_ref[...].astype(jnp.bfloat16)                                 # in-kernel cast
    h1 = jnp.dot(x, w1_ref[...], preferred_element_type=jnp.float32)    # f32 (tb, 512)
    h1 = jnp.maximum(h1 + b1_ref[...], 0.0).astype(jnp.bfloat16)
    h2 = jnp.dot(h1, w2_ref[...], preferred_element_type=jnp.float32)   # f32 (tb, 512)
    h2 = jnp.maximum(h2 + b2_ref[...], 0.0).astype(jnp.bfloat16)
    h3 = jnp.dot(h2, w3_ref[...], preferred_element_type=jnp.float32)   # f32 (tb, 128)
    o_ref[...] = (h3 + b3_ref[...]).astype(o_ref.dtype)


def custom_nn_forward(x, prepared_params, out_dim=10):
    """x: (B, C, H, W) or (B, D_in) float32. prepared_params from prepare_params().
    Returns logits (B, out_dim) float32 (eval mode)."""
    w1p, b1p, w2p, b2p, w3p, b3p = prepared_params
    B = x.shape[0]
    d_in = w1p.shape[0]
    hp, op = HIDDEN_PAD, OUT_PAD

    # Flatten (x.view(B, -1)) — a free reshape; the bf16 cast happens inside the kernel.
    x2d = x.reshape(B, -1).astype(jnp.float32)

    tile_b, num_tiles = _choose_tiling(B)
    b_pad = tile_b * num_tiles
    if b_pad != B:
        x2d = jnp.pad(x2d, ((0, b_pad - B), (0, 0)))
    grid = (num_tiles,)

    def const_spec(shape):
        # Weight / bias blocks never change across the grid: single VMEM buffer.
        return pl.BlockSpec(shape, lambda i: (0,) * len(shape),
                            pipeline_mode=pl.Buffered(1))

    flops = 2 * b_pad * (d_in * hp + hp * hp + hp * op)
    bytes_accessed = (
        x2d.size * 4                                   # f32 activations in
        + (w1p.size + w2p.size + w3p.size) * 2         # bf16 weights
        + (b1p.size + b2p.size + b3p.size) * 4         # f32 biases
        + b_pad * op * 4                               # f32 logits out
    )

    out = pl.pallas_call(
        mlp_kernel,
        out_shape=jax.ShapeDtypeStruct((b_pad, op), jnp.float32),
        grid=grid,
        in_specs=[
            pl.BlockSpec((tile_b, d_in), lambda i: (i, 0)),
            const_spec(w1p.shape), const_spec(b1p.shape),
            const_spec(w2p.shape), const_spec(b2p.shape),
            const_spec(w3p.shape), const_spec(b3p.shape),
        ],
        out_specs=pl.BlockSpec((tile_b, op), lambda i: (i, 0)),
        compiler_params=pltpu.CompilerParams(dimension_semantics=("parallel",)),
        cost_estimate=pl.CostEstimate(
            flops=flops, transcendentals=0, bytes_accessed=bytes_accessed),
    )(x2d, w1p, b1p, w2p, b2p, w3p, b3p)

    # Slice off batch padding and the padded (all-zero) logit columns.
    return out[:B, :out_dim]


def init_params(key, input_size=28 * 28, hidden_size=400, output_size=10):
    """Deterministic init mimicking nn.Linear default: U(-1/sqrt(fan_in), 1/sqrt(fan_in))."""
    def linear(k, fan_in, fan_out):
        kw, kb = jax.random.split(k)
        bound = 1.0 / jnp.sqrt(fan_in)
        w = jax.random.uniform(kw, (fan_in, fan_out), jnp.float32, -bound, bound)
        b = jax.random.uniform(kb, (fan_out,), jnp.float32, -bound, bound)  # PyTorch-style (N,)
        return w, b

    k1, k2, k3 = jax.random.split(key, 3)
    w1, b1 = linear(k1, input_size, hidden_size)
    w2, b2 = linear(k2, hidden_size, hidden_size)
    w3, b3 = linear(k3, hidden_size, output_size)
    return (w1, b1, w2, b2, w3, b3)


def reference_forward(x, params):
    """Pure-JAX f32 reference (eval mode: dropout == identity)."""
    w1, b1, w2, b2, w3, b3 = params
    h = x.reshape(x.shape[0], -1).astype(jnp.float32)
    h = jnp.maximum(h @ w1 + b1.reshape(1, -1), 0.0)
    h = jnp.maximum(h @ w2 + b2.reshape(1, -1), 0.0)
    return h @ w3 + b3.reshape(1, -1)


if __name__ == "__main__":
    key = jax.random.PRNGKey(0)
    k_param, k_x = jax.random.split(key)

    # Small batch, MNIST-shaped input (NCHW) consistent with input_size=28*28.
    x = jax.random.normal(k_x, (8, 1, 28, 28), dtype=jnp.float32)
    params = init_params(k_param)

    # One-time weight preparation (padding + bf16 cast), then the fused forward.
    prepared, out_dim = prepare_params(params)
    out = custom_nn_forward(x, prepared, out_dim)
    out = jax.block_until_ready(out)

    ref = reference_forward(x, params)
    assert out.shape == (8, 10), out.shape
    # bf16 matmul operands with f32 accumulation: expect ~1e-2 absolute agreement.
    assert jnp.allclose(out, ref, atol=3e-2, rtol=3e-2), (
        "mismatch vs reference; max abs diff = %s" % jnp.max(jnp.abs(out - ref)))

    print("KERNEL_OK")
</pallas_src>

<mosaic_0001>
module attributes {stable_mosaic.version = 11 : i64} {
  func.func @mlp_kernel(%arg0: i32, %arg1: memref<16x784xf32, #tpu.memory_space<vmem>>, %arg2: memref<784x512xbf16, #tpu.memory_space<vmem>>, %arg3: memref<1x512xf32, #tpu.memory_space<vmem>>, %arg4: memref<512x512xbf16, #tpu.memory_space<vmem>>, %arg5: memref<1x512xf32, #tpu.memory_space<vmem>>, %arg6: memref<512x128xbf16, #tpu.memory_space<vmem>>, %arg7: memref<1x128xf32, #tpu.memory_space<vmem>>, %arg8: memref<16x128xf32, #tpu.memory_space<vmem>>) attributes {dimension_semantics = [#tpu.dimension_semantics<parallel>], iteration_bounds = array<i64: 1>, scalar_prefetch = 0 : i64, scratch_operands = 0 : i64, tpu.core_type = #tpu.core_type<tc>, window_params = [{transform_indices = @transform_0, window_bounds = array<i64: 16, 784>}, {pipeline_mode = #tpu.pipeline_mode<synchronous>, transform_indices = @transform_1, window_bounds = array<i64: 784, 512>}, {pipeline_mode = #tpu.pipeline_mode<synchronous>, transform_indices = @transform_2, window_bounds = array<i64: 1, 512>}, {pipeline_mode = #tpu.pipeline_mode<synchronous>, transform_indices = @transform_3, window_bounds = array<i64: 512, 512>}, {pipeline_mode = #tpu.pipeline_mode<synchronous>, transform_indices = @transform_4, window_bounds = array<i64: 1, 512>}, {pipeline_mode = #tpu.pipeline_mode<synchronous>, transform_indices = @transform_5, window_bounds = array<i64: 512, 128>}, {pipeline_mode = #tpu.pipeline_mode<synchronous>, transform_indices = @transform_6, window_bounds = array<i64: 1, 128>}, {transform_indices = @transform_7, window_bounds = array<i64: 16, 128>}]} {
    %c0 = arith.constant 0 : index
    %c0_0 = arith.constant 0 : index
    %0 = vector.load %arg1[%c0, %c0_0] : memref<16x784xf32, #tpu.memory_space<vmem>>, vector<16x784xf32>
    %1 = arith.truncf %0 : vector<16x784xf32> to vector<16x784xbf16>
    %c0_1 = arith.constant 0 : index
    %c0_2 = arith.constant 0 : index
    %2 = vector.load %arg2[%c0_1, %c0_2] : memref<784x512xbf16, #tpu.memory_space<vmem>>, vector<784x512xbf16>
    %cst = arith.constant dense<0.000000e+00> : vector<16x512xf32>
    %3 = tpu.matmul %1, %2, %cst {dimension_numbers = #tpu.dot_dimension_numbers<[1], [0], [0], [1], [0, 0, 1, 1], [], []>} : vector<16x784xbf16>, vector<784x512xbf16>, vector<16x512xf32> -> vector<16x512xf32>
    %c0_3 = arith.constant 0 : index
    %c0_4 = arith.constant 0 : index
    %4 = vector.load %arg3[%c0_3, %c0_4] : memref<1x512xf32, #tpu.memory_space<vmem>>, vector<1x512xf32>
    %5 = vector.broadcast %4 : vector<1x512xf32> to vector<16x512xf32>
    %6 = arith.addf %3, %5 : vector<16x512xf32>
    %cst_5 = arith.constant 0.000000e+00 : f32
    %7 = vector.broadcast %cst_5 : f32 to vector<16x512xf32>
    %8 = arith.maximumf %6, %7 : vector<16x512xf32>
    %9 = arith.truncf %8 : vector<16x512xf32> to vector<16x512xbf16>
    %c0_6 = arith.constant 0 : index
    %c0_7 = arith.constant 0 : index
    %10 = vector.load %arg4[%c0_6, %c0_7] : memref<512x512xbf16, #tpu.memory_space<vmem>>, vector<512x512xbf16>
    %cst_8 = arith.constant dense<0.000000e+00> : vector<16x512xf32>
    %11 = tpu.matmul %9, %10, %cst_8 {dimension_numbers = #tpu.dot_dimension_numbers<[1], [0], [0], [1], [0, 0, 1, 1], [], []>} : vector<16x512xbf16>, vector<512x512xbf16>, vector<16x512xf32> -> vector<16x512xf32>
    %c0_9 = arith.constant 0 : index
    %c0_10 = arith.constant 0 : index
    %12 = vector.load %arg5[%c0_9, %c0_10] : memref<1x512xf32, #tpu.memory_space<vmem>>, vector<1x512xf32>
    %13 = vector.broadcast %12 : vector<1x512xf32> to vector<16x512xf32>
    %14 = arith.addf %11, %13 : vector<16x512xf32>
    %cst_11 = arith.constant 0.000000e+00 : f32
    %15 = vector.broadcast %cst_11 : f32 to vector<16x512xf32>
    %16 = arith.maximumf %14, %15 : vector<16x512xf32>
    %17 = arith.truncf %16 : vector<16x512xf32> to vector<16x512xbf16>
    %c0_12 = arith.constant 0 : index
    %c0_13 = arith.constant 0 : index
    %18 = vector.load %arg6[%c0_12, %c0_13] : memref<512x128xbf16, #tpu.memory_space<vmem>>, vector<512x128xbf16>
    %cst_14 = arith.constant dense<0.000000e+00> : vector<16x128xf32>
    %19 = tpu.matmul %17, %18, %cst_14 {dimension_numbers = #tpu.dot_dimension_numbers<[1], [0], [0], [1], [0, 0, 1, 1], [], []>} : vector<16x512xbf16>, vector<512x128xbf16>, vector<16x128xf32> -> vector<16x128xf32>
    %c0_15 = arith.constant 0 : index
    %c0_16 = arith.constant 0 : index
    %20 = vector.load %arg7[%c0_15, %c0_16] : memref<1x128xf32, #tpu.memory_space<vmem>>, vector<1x128xf32>
    %21 = vector.broadcast %20 : vector<1x128xf32> to vector<16x128xf32>
    %22 = arith.addf %19, %21 : vector<16x128xf32>
    %c0_17 = arith.constant 0 : index
    %c0_18 = arith.constant 0 : index
    %23 = vector.load %arg8[%c0_17, %c0_18] : memref<16x128xf32, #tpu.memory_space<vmem>>, vector<16x128xf32>
    tpu.vector_store %arg8[%c0_17, %c0_18], %22 {strides = array<i32>} : memref<16x128xf32, #tpu.memory_space<vmem>>, vector<16x128xf32>,
    return
  }
  func.func @transform_0(%arg0: i32) -> (i32, i32) {
    %c0_i32 = arith.constant 0 : i32
    %c0_i32_0 = arith.constant 0 : i32
    return %arg0, %c0_i32 : i32, i32
  }
  func.func @transform_1(%arg0: i32) -> (i32, i32) {
    %c0_i32 = arith.constant 0 : i32
    %c0_i32_0 = arith.constant 0 : i32
    %c0_i32_1 = arith.constant 0 : i32
    return %c0_i32, %c0_i32_0 : i32, i32
  }
  func.func @transform_2(%arg0: i32) -> (i32, i32) {
    %c0_i32 = arith.constant 0 : i32
    %c0_i32_0 = arith.constant 0 : i32
    %c0_i32_1 = arith.constant 0 : i32
    return %c0_i32, %c0_i32_0 : i32, i32
  }
  func.func @transform_3(%arg0: i32) -> (i32, i32) {
    %c0_i32 = arith.constant 0 : i32
    %c0_i32_0 = arith.constant 0 : i32
    %c0_i32_1 = arith.constant 0 : i32
    return %c0_i32, %c0_i32_0 : i32, i32
  }
  func.func @transform_4(%arg0: i32) -> (i32, i32) {
    %c0_i32 = arith.constant 0 : i32
    %c0_i32_0 = arith.constant 0 : i32
    %c0_i32_1 = arith.constant 0 : i32
    return %c0_i32, %c0_i32_0 : i32, i32
  }
  func.func @transform_5(%arg0: i32) -> (i32, i32) {
    %c0_i32 = arith.constant 0 : i32
    %c0_i32_0 = arith.constant 0 : i32
    %c0_i32_1 = arith.constant 0 : i32
    return %c0_i32, %c0_i32_0 : i32, i32
  }
  func.func @transform_6(%arg0: i32) -> (i32, i32) {
    %c0_i32 = arith.constant 0 : i32
    %c0_i32_0 = arith.constant 0 : i32
    %c0_i32_1 = arith.constant 0 : i32
    return %c0_i32, %c0_i32_0 : i32, i32
  }
  func.func @transform_7(%arg0: i32) -> (i32, i32) {
    %c0_i32 = arith.constant 0 : i32
    %c0_i32_0 = arith.constant 0 : i32
    return %arg0, %c0_i32 : i32, i32
  }
}

</mosaic_0001>

<llo_original>
// kernel: tpu_custom_call.1
$region0: #{tpu_custom_call.1}
  #allocation0 [shape = 'u32[]', space=smem, size = 0x4, offset = 0x4, fixed_abs, tag = 'smem constant byte address 0x4 - core index']
  #allocation1 [shape = 'u32[72,128]{1,0:T(1,128)}', space=vmem, size = 0x9000, scoped, tag = 'internal scratch']
  %s0 = inlined_call_operand.hbm [shape: f32[16,784], index: 0, kind: input, shape index: {}]
  %s1 = inlined_call_operand.hbm [shape: bf16[784,512], index: 1, kind: input, shape index: {}]
  %s2 = inlined_call_operand.hbm [shape: f32[1,512], index: 2, kind: input, shape index: {}]
  %s3 = inlined_call_operand.hbm [shape: bf16[512,512], index: 3, kind: input, shape index: {}]
  %s4 = inlined_call_operand.hbm [shape: f32[1,512], index: 4, kind: input, shape index: {}]
  %s5 = inlined_call_operand.hbm [shape: bf16[512,128], index: 5, kind: input, shape index: {}]
  %s6 = inlined_call_operand.vmem [shape: f32[1,128], index: 6, kind: input, shape index: {}]
  %s7 = inlined_call_operand.hbm [shape: f32[16,128], index: 7, kind: output, shape index: {}]
  %s8 = sld [smem:[#allocation0]]
  $region62: #{tpu_custom_call.1} parent=0
    _
  %s10 = ssub.s32 1, %s8
  %s11 = scalar_select 0, %s10, %s8
  $region1: #{tpu_custom_call.1} parent=0
    #allocation2 [shape = 'u8[57344]{0}', space=vmem, size = 0xe000, scoped, tag = 'input window, operand 0, single buffered']
    #allocation3 [shape = 's32[1]{0}', space=sflag, size = 0x4, scoped, tag = 'scoped memory for tpu_custom_call.1']
    #allocation4 [shape = 's32[1]{0}', space=sflag, size = 0x4, scoped, tag = 'scoped memory for tpu_custom_call.1']
    #allocation5 [shape = 'u8[802816]{0}', space=vmem, size = 0xc4000, scoped, tag = 'input window, operand 1, single buffered']
    #allocation6 [shape = 's32[1]{0}', space=sflag, size = 0x4, scoped, tag = 'scoped memory for tpu_custom_call.1']
    #allocation7 [shape = 'u8[2048]{0}', space=vmem, size = 0x800, scoped, tag = 'input window, operand 2, single buffered']
    #allocation8 [shape = 'u8[524288]{0}', space=vmem, size = 0x80000, scoped, tag = 'input window, operand 3, single buffered']
    #allocation9 [shape = 's32[1]{0}', space=sflag, size = 0x4, scoped, tag = 'scoped memory for tpu_custom_call.1']
    #allocation10 [shape = 'u8[2048]{0}', space=vmem, size = 0x800, scoped, tag = 'input window, operand 4, single buffered']
    #allocation11 [shape = 'u8[131072]{0}', space=vmem, size = 0x20000, scoped, tag = 'input window, operand 5, single buffered']
    #allocation12 [shape = 's32[1]{0}', space=sflag, size = 0x4, scoped, tag = 'scoped memory for tpu_custom_call.1']
    #allocation13 [shape = 'u8[8192]{0}', space=vmem, size = 0x2000, scoped, tag = 'output window, operand 0, single buffered']
    %12 = vsyncpa [#allocation3], 0
    %13 = vsyncpa [#allocation6], 0
    %14 = vsyncpa [#allocation9], 0
    %15 = vsyncpa [#allocation12], 0
    %16 = vsyncpa [#allocation4], 0
    // Predicated region
    $region2: #{tpu_custom_call.1} parent=1 // pred_check
      _
    $region3: #{tpu_custom_call.1} parent=1 // pred_check_branch
      %18 = sbr.rel (0) target = $region5
    $region4: #{tpu_custom_call.1} parent=1 // pred_region
      %20 = vsyncadd [#allocation3], 0
      %s21 = sshll.u32 %s0, 4
      %s22 = int_to_ptr.hbm [resolvable:$true] %s21
      %s23 = sshll.u32 [#allocation2], 4
      %s24 = int_to_ptr.vmem [resolvable:$true] %s23
      %29 = dma.hbm_to_vmem [thread:$0]  %s22, 1792, %s24, [#allocation3], 896, 896, 56
    $region5: #{tpu_custom_call.1} parent=1 // pred_fallthru
      _
    // Predicated region
    $region6: #{tpu_custom_call.1} parent=1 // pred_check
      _
    $region7: #{tpu_custom_call.1} parent=1 // pred_check_branch
      %31 = sbr.rel (0) target = $region9
    $region8: #{tpu_custom_call.1} parent=1 // pred_region
      %33 = vsyncadd [#allocation6], 0
      %s34 = sshll.u32 %s1, 4
      %s35 = int_to_ptr.hbm [resolvable:$true] %s34
      %s36 = sshll.u32 [#allocation5], 4
      %s37 = int_to_ptr.vmem [resolvable:$true] %s36
      %42 = dma.hbm_to_vmem [thread:$0]  %s35, 25088, %s37, [#allocation6], 256, 256, 16
    $region9: #{tpu_custom_call.1} parent=1 // pred_fallthru
      _
    // Predicated region
    $region10: #{tpu_custom_call.1} parent=1 // pred_check
      _
    $region11: #{tpu_custom_call.1} parent=1 // pred_check_branch
      %44 = sbr.rel (0) target = $region13
    $region12: #{tpu_custom_call.1} parent=1 // pred_region
      %46 = vsyncadd [#allocation6], 0
      %s48 = sshll.u32 %s2, 4
      %s49 = int_to_ptr.hbm [resolvable:$true] %s48
      %s50 = sshll.u32 [#allocation7], 4
      %s51 = int_to_ptr.vmem [resolvable:$true] %s50
      %53 = dma.hbm_to_vmem [thread:$0]  %s49, 64, %s51, [#allocation6]
    $region13: #{tpu_custom_call.1} parent=1 // pred_fallthru
      _
    // Predicated region
    $region14: #{tpu_custom_call.1} parent=1 // pred_check
      _
    $region15: #{tpu_custom_call.1} parent=1 // pred_check_branch
      %55 = sbr.rel (0) target = $region17
    $region16: #{tpu_custom_call.1} parent=1 // pred_region
      %57 = vsyncadd [#allocation9], 0
      %s58 = sshll.u32 %s3, 4
      %s59 = int_to_ptr.hbm [resolvable:$true] %s58
      %s60 = sshll.u32 [#allocation8], 4
      %s61 = int_to_ptr.vmem [resolvable:$true] %s60
      %66 = dma.hbm_to_vmem [thread:$0]  %s59, 16384, %s61, [#allocation9], 256, 256, 16
    $region17: #{tpu_custom_call.1} parent=1 // pred_fallthru
      _
    // Predicated region
    $region18: #{tpu_custom_call.1} parent=1 // pred_check
      _
    $region19: #{tpu_custom_call.1} parent=1 // pred_check_branch
      %68 = sbr.rel (0) target = $region21
    $region20: #{tpu_custom_call.1} parent=1 // pred_region
      %70 = vsyncadd [#allocation9], 0
      %s72 = sshll.u32 %s4, 4
      %s73 = int_to_ptr.hbm [resolvable:$true] %s72
      %s74 = sshll.u32 [#allocation10], 4
      %s75 = int_to_ptr.vmem [resolvable:$true] %s74
      %77 = dma.hbm_to_vmem [thread:$0]  %s73, 64, %s75, [#allocation9]
    $region21: #{tpu_custom_call.1} parent=1 // pred_fallthru
      _
    // Predicated region
    $region22: #{tpu_custom_call.1} parent=1 // pred_check
      _
    $region23: #{tpu_custom_call.1} parent=1 // pred_check_branch
      %79 = sbr.rel (0) target = $region25
    $region24: #{tpu_custom_call.1} parent=1 // pred_region
      %81 = vsyncadd [#allocation12], 0
      %s82 = sshll.u32 %s5, 4
      %s83 = int_to_ptr.hbm [resolvable:$true] %s82
      %s84 = sshll.u32 [#allocation11], 4
      %s85 = int_to_ptr.vmem [resolvable:$true] %s84
      %90 = dma.hbm_to_vmem [thread:$0]  %s83, 4096, %s85, [#allocation12], 64, 64, 4
    $region25: #{tpu_custom_call.1} parent=1 // pred_fallthru
      _
    // Predicated region
    $region26: #{tpu_custom_call.1} parent=1 // pred_check
      _
    $region27: #{tpu_custom_call.1} parent=1 // pred_check_branch
      %92 = sbr.rel (0) target = $region29
    $region28: #{tpu_custom_call.1} parent=1 // pred_region
      _
    $region29: #{tpu_custom_call.1} parent=1 // pred_fallthru
      _
    // Predicated region
    $region30: #{tpu_custom_call.1} parent=1 // pred_check
      _
    $region31: #{tpu_custom_call.1} parent=1 // pred_check_branch
      %94 = sbr.rel (0) target = $region33
    $region32: #{tpu_custom_call.1} parent=1 // pred_region
      %96 = dma.done [#allocation3], 1792
    $region33: #{tpu_custom_call.1} parent=1 // pred_fallthru
      _
    // Predicated region
    $region34: #{tpu_custom_call.1} parent=1 // pred_check
      _
    $region35: #{tpu_custom_call.1} parent=1 // pred_check_branch
      %98 = sbr.rel (0) target = $region37
    $region36: #{tpu_custom_call.1} parent=1 // pred_region
      %100 = dma.done [#allocation6], 25088
    $region37: #{tpu_custom_call.1} parent=1 // pred_fallthru
      _
    // Predicated region
    $region38: #{tpu_custom_call.1} parent=1 // pred_check
      _
    $region39: #{tpu_custom_call.1} parent=1 // pred_check_branch
      %102 = sbr.rel (0) target = $region41
    $region40: #{tpu_custom_call.1} parent=1 // pred_region
      %104 = dma.done [#allocation6], 64
    $region41: #{tpu_custom_call.1} parent=1 // pred_fallthru
      _
    // Predicated region
    $region42: #{tpu_custom_call.1} parent=1 // pred_check
      _
    $region43: #{tpu_custom_call.1} parent=1 // pred_check_branch
      %106 = sbr.rel (0) target = $region45
    $region44: #{tpu_custom_call.1} parent=1 // pred_region
      %108 = dma.done [#allocation9], 16384
    $region45: #{tpu_custom_call.1} parent=1 // pred_fallthru
      _
    // Predicated region
    $region46: #{tpu_custom_call.1} parent=1 // pred_check
      _
    $region47: #{tpu_custom_call.1} parent=1 // pred_check_branch
      %110 = sbr.rel (0) target = $region49
    $region48: #{tpu_custom_call.1} parent=1 // pred_region
      %112 = dma.done [#allocation9], 64
    $region49: #{tpu_custom_call.1} parent=1 // pred_fallthru
      _
    // Predicated region
    $region50: #{tpu_custom_call.1} parent=1 // pred_check
      _
    $region51: #{tpu_custom_call.1} parent=1 // pred_check_branch
      %114 = sbr.rel (0) target = $region53
    $region52: #{tpu_custom_call.1} parent=1 // pred_region
      %116 = dma.done [#allocation12], 4096
    $region53: #{tpu_custom_call.1} parent=1 // pred_fallthru
      _
    %v118 = vld [vmem:[#allocation2] sm:$0xff]
    %v119 = vld [vmem:[#allocation2 + $0x8] sm:$0xff]
    %v120 = vld [vmem:[#allocation2 + $0x10] sm:$0xff]
    %v121 = vld [vmem:[#allocation2 + $0x18] sm:$0xff]
    %v122 = vld [vmem:[#allocation2 + $0x20] sm:$0xff]
    %v123 = vld [vmem:[#allocation2 + $0x28] sm:$0xff]
    %v124 = vld [vmem:[#allocation2 + $0x30] sm:$0xff]
    %v125 = vld [vmem:[#allocation2 + $0x38] sm:$0xff]
    %v126 = vld [vmem:[#allocation2 + $0x40] sm:$0xff]
    %v127 = vld [vmem:[#allocation2 + $0x48] sm:$0xff]
    %v128 = vld [vmem:[#allocation2 + $0x50] sm:$0xff]
    %v129 = vld [vmem:[#allocation2 + $0x58] sm:$0xff]
    %v130 = vld [vmem:[#allocation2 + $0x60] sm:$0xff]
    %v131 = vld [vmem:[#allocation2 + $0x68] sm:$0xff]
    %v132 = vpack.c.bf16 %v125, %v118
    %v133 = vpack.c.bf16 %v126, %v119
    %v134 = vpack.c.bf16 %v127, %v120
    %v135 = vpack.c.bf16 %v128, %v121
    %v136 = vpack.c.bf16 %v129, %v122
    %v137 = vpack.c.bf16 %v130, %v123
    %v138 = vpack.c.bf16 %v131, %v124
    %v139 = vld [vmem:[#allocation5] sm:$0xff]
    %v140 = vld [vmem:[#allocation5 + $0x8] sm:$0xff]
    %v141 = vld [vmem:[#allocation5 + $0x10] sm:$0xff]
    %v142 = vld [vmem:[#allocation5 + $0x18] sm:$0xff]
    %v143 = vld [vmem:[#allocation5 + $0x20] sm:$0xff]
    %v144 = vld [vmem:[#allocation5 + $0x28] sm:$0xff]
    %v145 = vld [vmem:[#allocation5 + $0x30] sm:$0xff]
    %v146 = vld [vmem:[#allocation5 + $0x38] sm:$0xff]
    %v147 = vld [vmem:[#allocation5 + $0x40] sm:$0xff]
    %v148 = vld [vmem:[#allocation5 + $0x48] sm:$0xff]
    %v149 = vld [vmem:[#allocation5 + $0x50] sm:$0xff]
    %v150 = vld [vmem:[#allocation5 + $0x58] sm:$0xff]
    %v151 = vld [vmem:[#allocation5 + $0x60] sm:$0xff]
    %v152 = vld [vmem:[#allocation5 + $0x68] sm:$0xff]
    %v153 = vld [vmem:[#allocation5 + $0x70] sm:$0xff]
    %v154 = vld [vmem:[#allocation5 + $0x78] sm:$0xff]
    %v155 = vld [vmem:[#allocation5 + $0x80] sm:$0xff]
    %v156 = vld [vmem:[#allocation5 + $0x88] sm:$0xff]
    %v157 = vld [vmem:[#allocation5 + $0x90] sm:$0xff]
    %v158 = vld [vmem:[#allocation5 + $0x98] sm:$0xff]
    %v159 = vld [vmem:[#allocation5 + $0xa0] sm:$0xff]
    %v160 = vld [vmem:[#allocation5 + $0xa8] sm:$0xff]
    %v161 = vld [vmem:[#allocation5 + $0xb0] sm:$0xff]
    %v162 = vld [vmem:[#allocation5 + $0xb8] sm:$0xff]
    %v163 = vld [vmem:[#allocation5 + $0xc0] sm:$0xff]
    %v164 = vld [vmem:[#allocation5 + $0xc8] sm:$0xff]
    %v165 = vld [vmem:[#allocation5 + $0xd0] sm:$0xff]
    %v166 = vld [vmem:[#allocation5 + $0xd8] sm:$0xff]
    %v167 = vld [vmem:[#allocation5 + $0xe0] sm:$0xff]
    %v168 = vld [vmem:[#allocation5 + $0xe8] sm:$0xff]
    %v169 = vld [vmem:[#allocation5 + $0xf0] sm:$0xff]
    %v170 = vld [vmem:[#allocation5 + $0xf8] sm:$0xff]
    %v171 = vld [vmem:[#allocation5 + $0x100] sm:$0xff]
    %v172 = vld [vmem:[#allocation5 + $0x108] sm:$0xff]
    %v173 = vld [vmem:[#allocation5 + $0x110] sm:$0xff]
    %v174 = vld [vmem:[#allocation5 + $0x118] sm:$0xff]
    %v175 = vld [vmem:[#allocation5 + $0x120] sm:$0xff]
    %v176 = vld [vmem:[#allocation5 + $0x128] sm:$0xff]
    %v177 = vld [vmem:[#allocation5 + $0x130] sm:$0xff]
    %v178 = vld [vmem:[#allocation5 + $0x138] sm:$0xff]
    %v179 = vld [vmem:[#allocation5 + $0x140] sm:$0xff]
    %v180 = vld [vmem:[#allocation5 + $0x148] sm:$0xff]
    %v181 = vld [vmem:[#allocation5 + $0x150] sm:$0xff]
    %v182 = vld [vmem:[#allocation5 + $0x158] sm:$0xff]
    %v183 = vld [vmem:[#allocation5 + $0x160] sm:$0xff]
    %v184 = vld [vmem:[#allocation5 + $0x168] sm:$0xff]
    %v185 = vld [vmem:[#allocation5 + $0x170] sm:$0xff]
    %v186 = vld [vmem:[#allocation5 + $0x178] sm:$0xff]
    %v187 = vld [vmem:[#allocation5 + $0x180] sm:$0xff]
    %v188 = vld [vmem:[#allocation5 + $0x188] sm:$0xff]
    %v189 = vld [vmem:[#allocation5 + $0x190] sm:$0xff]
    %v190 = vld [vmem:[#allocation5 + $0x198] sm:$0xff]
    %v191 = vld [vmem:[#allocation5 + $0x1a0] sm:$0xff]
    %v192 = vld [vmem:[#allocation5 + $0x1a8] sm:$0xff]
    %v193 = vld [vmem:[#allocation5 + $0x1b0] sm:$0xff]
    %v194 = vld [vmem:[#allocation5 + $0x1b8] sm:$0xff]
    %v195 = vld [vmem:[#allocation5 + $0x1c0] sm:$0xff]
    %v196 = vld [vmem:[#allocation5 + $0x1c8] sm:$0xff]
    %v197 = vld [vmem:[#allocation5 + $0x1d0] sm:$0xff]
    %v198 = vld [vmem:[#allocation5 + $0x1d8] sm:$0xff]
    %v199 = vld [vmem:[#allocation5 + $0x1e0] sm:$0xff]
    %v200 = vld [vmem:[#allocation5 + $0x1e8] sm:$0xff]
    %v201 = vld [vmem:[#allocation5 + $0x1f0] sm:$0xff]
    %v202 = vld [vmem:[#allocation5 + $0x1f8] sm:$0xff]
    %v203 = vld [vmem:[#allocation5 + $0x200] sm:$0xff]
    %v204 = vld [vmem:[#allocation5 + $0x208] sm:$0xff]
    %v205 = vld [vmem:[#allocation5 + $0x210] sm:$0xff]
    %v206 = vld [vmem:[#allocation5 + $0x218] sm:$0xff]
    %v207 = vld [vmem:[#allocation5 + $0x220] sm:$0xff]
    %v208 = vld [vmem:[#allocation5 + $0x228] sm:$0xff]
    %v209 = vld [vmem:[#allocation5 + $0x230] sm:$0xff]
    %v210 = vld [vmem:[#allocation5 + $0x238] sm:$0xff]
    %v211 = vld [vmem:[#allocation5 + $0x240] sm:$0xff]
    %v212 = vld [vmem:[#allocation5 + $0x248] sm:$0xff]
    %v213 = vld [vmem:[#allocation5 + $0x250] sm:$0xff]
    %v214 = vld [vmem:[#allocation5 + $0x258] sm:$0xff]
    %v215 = vld [vmem:[#allocation5 + $0x260] sm:$0xff]
    %v216 = vld [vmem:[#allocation5 + $0x268] sm:$0xff]
    %v217 = vld [vmem:[#allocation5 + $0x270] sm:$0xff]
    %v218 = vld [vmem:[#allocation5 + $0x278] sm:$0xff]
    %v219 = vld [vmem:[#allocation5 + $0x280] sm:$0xff]
    %v220 = vld [vmem:[#allocation5 + $0x288] sm:$0xff]
    %v221 = vld [vmem:[#allocation5 + $0x290] sm:$0xff]
    %v222 = vld [vmem:[#allocation5 + $0x298] sm:$0xff]
    %v223 = vld [vmem:[#allocation5 + $0x2a0] sm:$0xff]
    %v224 = vld [vmem:[#allocation5 + $0x2a8] sm:$0xff]
    %v225 = vld [vmem:[#allocation5 + $0x2b0] sm:$0xff]
    %v226 = vld [vmem:[#allocation5 + $0x2b8] sm:$0xff]
    %v227 = vld [vmem:[#allocation5 + $0x2c0] sm:$0xff]
    %v228 = vld [vmem:[#allocation5 + $0x2c8] sm:$0xff]
    %v229 = vld [vmem:[#allocation5 + $0x2d0] sm:$0xff]
    %v230 = vld [vmem:[#allocation5 + $0x2d8] sm:$0xff]
    %v231 = vld [vmem:[#allocation5 + $0x2e0] sm:$0xff]
    %v232 = vld [vmem:[#allocation5 + $0x2e8] sm:$0xff]
    %v233 = vld [vmem:[#allocation5 + $0x2f0] sm:$0xff]
    %v234 = vld [vmem:[#allocation5 + $0x2f8] sm:$0xff]
    %v235 = vld [vmem:[#allocation5 + $0x300] sm:$0xff]
    %v236 = vld [vmem:[#allocation5 + $0x308] sm:$0xff]
    %v237 = vld [vmem:[#allocation5 + $0x310] sm:$0xff]
    %v238 = vld [vmem:[#allocation5 + $0x318] sm:$0xff]
    %v239 = vld [vmem:[#allocation5 + $0x320] sm:$0xff]
    %v240 = vld [vmem:[#allocation5 + $0x328] sm:$0xff]
    %v241 = vld [vmem:[#allocation5 + $0x330] sm:$0xff]
    %v242 = vld [vmem:[#allocation5 + $0x338] sm:$0xff]
    %v243 = vld [vmem:[#allocation5 + $0x340] sm:$0xff]
    %v244 = vld [vmem:[#allocation5 + $0x348] sm:$0xff]
    %v245 = vld [vmem:[#allocation5 + $0x350] sm:$0xff]
    %v246 = vld [vmem:[#allocation5 + $0x358] sm:$0xff]
    %v247 = vld [vmem:[#allocation5 + $0x360] sm:$0xff]
    %v248 = vld [vmem:[#allocation5 + $0x368] sm:$0xff]
    %v249 = vld [vmem:[#allocation5 + $0x370] sm:$0xff]
    %v250 = vld [vmem:[#allocation5 + $0x378] sm:$0xff]
    %v251 = vld [vmem:[#allocation5 + $0x380] sm:$0xff]
    %v252 = vld [vmem:[#allocation5 + $0x388] sm:$0xff]
    %v253 = vld [vmem:[#allocation5 + $0x390] sm:$0xff]
    %v254 = vld [vmem:[#allocation5 + $0x398] sm:$0xff]
    %v255 = vld [vmem:[#allocation5 + $0x3a0] sm:$0xff]
    %v256 = vld [vmem:[#allocation5 + $0x3a8] sm:$0xff]
    %v257 = vld [vmem:[#allocation5 + $0x3b0] sm:$0xff]
    %v258 = vld [vmem:[#allocation5 + $0x3b8] sm:$0xff]
    %v259 = vld [vmem:[#allocation5 + $0x3c0] sm:$0xff]
    %v260 = vld [vmem:[#allocation5 + $0x3c8] sm:$0xff]
    %v261 = vld [vmem:[#allocation5 + $0x3d0] sm:$0xff]
    %v262 = vld [vmem:[#allocation5 + $0x3d8] sm:$0xff]
    %v263 = vld [vmem:[#allocation5 + $0x3e0] sm:$0xff]
    %v264 = vld [vmem:[#allocation5 + $0x3e8] sm:$0xff]
    %v265 = vld [vmem:[#allocation5 + $0x3f0] sm:$0xff]
    %v266 = vld [vmem:[#allocation5 + $0x3f8] sm:$0xff]
    %v267 = vld [vmem:[#allocation5 + $0x400] sm:$0xff]
    %v268 = vld [vmem:[#allocation5 + $0x408] sm:$0xff]
    %v269 = vld [vmem:[#allocation5 + $0x410] sm:$0xff]
    %v270 = vld [vmem:[#allocation5 + $0x418] sm:$0xff]
    %v271 = vld [vmem:[#allocation5 + $0x420] sm:$0xff]
    %v272 = vld [vmem:[#allocation5 + $0x428] sm:$0xff]
    %v273 = vld [vmem:[#allocation5 + $0x430] sm:$0xff]
    %v274 = vld [vmem:[#allocation5 + $0x438] sm:$0xff]
    %v275 = vld [vmem:[#allocation5 + $0x440] sm:$0xff]
    %v276 = vld [vmem:[#allocation5 + $0x448] sm:$0xff]
    %v277 = vld [vmem:[#allocation5 + $0x450] sm:$0xff]
    %v278 = vld [vmem:[#allocation5 + $0x458] sm:$0xff]
    %v279 = vld [vmem:[#allocation5 + $0x460] sm:$0xff]
    %v280 = vld [vmem:[#allocation5 + $0x468] sm:$0xff]
    %v281 = vld [vmem:[#allocation5 + $0x470] sm:$0xff]
    %v282 = vld [vmem:[#allocation5 + $0x478] sm:$0xff]
    %v283 = vld [vmem:[#allocation5 + $0x480] sm:$0xff]
    %v284 = vld [vmem:[#allocation5 + $0x488] sm:$0xff]
    %v285 = vld [vmem:[#allocation5 + $0x490] sm:$0xff]
    %v286 = vld [vmem:[#allocation5 + $0x498] sm:$0xff]
    %v287 = vld [vmem:[#allocation5 + $0x4a0] sm:$0xff]
    %v288 = vld [vmem:[#allocation5 + $0x4a8] sm:$0xff]
    %v289 = vld [vmem:[#allocation5 + $0x4b0] sm:$0xff]
    %v290 = vld [vmem:[#allocation5 + $0x4b8] sm:$0xff]
    %v291 = vld [vmem:[#allocation5 + $0x4c0] sm:$0xff]
    %v292 = vld [vmem:[#allocation5 + $0x4c8] sm:$0xff]
    %v293 = vld [vmem:[#allocation5 + $0x4d0] sm:$0xff]
    %v294 = vld [vmem:[#allocation5 + $0x4d8] sm:$0xff]
    %v295 = vld [vmem:[#allocation5 + $0x4e0] sm:$0xff]
    %v296 = vld [vmem:[#allocation5 + $0x4e8] sm:$0xff]
    %v297 = vld [vmem:[#allocation5 + $0x4f0] sm:$0xff]
    %v298 = vld [vmem:[#allocation5 + $0x4f8] sm:$0xff]
    %v299 = vld [vmem:[#allocation5 + $0x500] sm:$0xff]
    %v300 = vld [vmem:[#allocation5 + $0x508] sm:$0xff]
    %v301 = vld [vmem:[#allocation5 + $0x510] sm:$0xff]
    %v302 = vld [vmem:[#allocation5 + $0x518] sm:$0xff]
    %v303 = vld [vmem:[#allocation5 + $0x520] sm:$0xff]
    %v304 = vld [vmem:[#allocation5 + $0x528] sm:$0xff]
    %v305 = vld [vmem:[#allocation5 + $0x530] sm:$0xff]
    %v306 = vld [vmem:[#allocation5 + $0x538] sm:$0xff]
    %v307 = vld [vmem:[#allocation5 + $0x540] sm:$0xff]
    %v308 = vld [vmem:[#allocation5 + $0x548] sm:$0xff]
    %v309 = vld [vmem:[#allocation5 + $0x550] sm:$0xff]
    %v310 = vld [vmem:[#allocation5 + $0x558] sm:$0xff]
    %v311 = vld [vmem:[#allocation5 + $0x560] sm:$0xff]
    %v312 = vld [vmem:[#allocation5 + $0x568] sm:$0xff]
    %v313 = vld [vmem:[#allocation5 + $0x570] sm:$0xff]
    %v314 = vld [vmem:[#allocation5 + $0x578] sm:$0xff]
    %v315 = vld [vmem:[#allocation5 + $0x580] sm:$0xff]
    %v316 = vld [vmem:[#allocation5 + $0x588] sm:$0xff]
    %v317 = vld [vmem:[#allocation5 + $0x590] sm:$0xff]
    %v318 = vld [vmem:[#allocation5 + $0x598] sm:$0xff]
    %v319 = vld [vmem:[#allocation5 + $0x5a0] sm:$0xff]
    %v320 = vld [vmem:[#allocation5 + $0x5a8] sm:$0xff]
    %v321 = vld [vmem:[#allocation5 + $0x5b0] sm:$0xff]
    %v322 = vld [vmem:[#allocation5 + $0x5b8] sm:$0xff]
    %v323 = vld [vmem:[#allocation5 + $0x5c0] sm:$0xff]
    %v324 = vld [vmem:[#allocation5 + $0x5c8] sm:$0xff]
    %v325 = vld [vmem:[#allocation5 + $0x5d0] sm:$0xff]
    %v326 = vld [vmem:[#allocation5 + $0x5d8] sm:$0xff]
    %v327 = vld [vmem:[#allocation5 + $0x5e0] sm:$0xff]
    %v328 = vld [vmem:[#allocation5 + $0x5e8] sm:$0xff]
    %v329 = vld [vmem:[#allocation5 + $0x5f0] sm:$0xff]
    %v330 = vld [vmem:[#allocation5 + $0x5f8] sm:$0xff]
    %v331 = vld [vmem:[#allocation5 + $0x600] sm:$0xff]
    %v332 = vld [vmem:[#allocation5 + $0x608] sm:$0xff]
    %v333 = vld [vmem:[#allocation5 + $0x610] sm:$0xff]
    %v334 = vld [vmem:[#allocation5 + $0x618] sm:$0xff]
    %v335 = vld [vmem:[#allocation7] sm:$0xf]
    %v337 = vperm.slane %v335, 0
    %v338 = vperm.slane %v335, 1
    %v339 = vperm.slane %v335, 2
    %v340 = vperm.slane %v335, 3
    %v541 = vunpack.c.l.b16 %v139
    %v542 = vunpack.c.h.b16 %v139
    %v543 = vunpack.c.l.b16 %v140
    %v544 = vunpack.c.h.b16 %v140
    %v545 = vunpack.c.l.b16 %v141
    %v546 = vunpack.c.h.b16 %v141
    %v547 = vunpack.c.l.b16 %v142
    %v548 = vunpack.c.h.b16 %v142
    %v549 = vunpack.c.l.b16 %v143
    %v550 = vunpack.c.h.b16 %v143
    %v551 = vunpack.c.l.b16 %v144
    %v552 = vunpack.c.h.b16 %v144
    %v553 = vunpack.c.l.b16 %v145
    %v554 = vunpack.c.h.b16 %v145
    %v555 = vunpack.c.l.b16 %v146
    %v556 = vunpack.c.h.b16 %v146
    %v557 = vunpack.c.l.b16 %v147
    %v558 = vunpack.c.h.b16 %v147
    %v559 = vunpack.c.l.b16 %v148
    %v560 = vunpack.c.h.b16 %v148
    %v561 = vunpack.c.l.b16 %v149
    %v562 = vunpack.c.h.b16 %v149
    %v563 = vunpack.c.l.b16 %v150
    %v564 = vunpack.c.h.b16 %v150
    %v565 = vunpack.c.l.b16 %v151
    %v566 = vunpack.c.h.b16 %v151
    %v567 = vunpack.c.l.b16 %v152
    %v568 = vunpack.c.h.b16 %v152
    %v569 = vunpack.c.l.b16 %v153
    %v570 = vunpack.c.h.b16 %v153
    %v571 = vunpack.c.l.b16 %v154
    %v572 = vunpack.c.h.b16 %v154
    %v573 = vunpack.c.l.b16 %v155
    %v574 = vunpack.c.h.b16 %v155
    %v575 = vunpack.c.l.b16 %v156
    %v576 = vunpack.c.h.b16 %v156
    %v577 = vunpack.c.l.b16 %v157
    %v578 = vunpack.c.h.b16 %v157
    %v579 = vunpack.c.l.b16 %v158
    %v580 = vunpack.c.h.b16 %v158
    %v581 = vunpack.c.l.b16 %v159
    %v582 = vunpack.c.h.b16 %v159
    %v583 = vunpack.c.l.b16 %v160
    %v584 = vunpack.c.h.b16 %v160
    %v585 = vunpack.c.l.b16 %v161
    %v586 = vunpack.c.h.b16 %v161
    %v587 = vunpack.c.l.b16 %v162
    %v588 = vunpack.c.h.b16 %v162
    %v589 = vunpack.c.l.b16 %v163
    %v590 = vunpack.c.h.b16 %v163
    %v591 = vunpack.c.l.b16 %v164
    %v592 = vunpack.c.h.b16 %v164
    %v593 = vunpack.c.l.b16 %v165
    %v594 = vunpack.c.h.b16 %v165
    %v595 = vunpack.c.l.b16 %v166
    %v596 = vunpack.c.h.b16 %v166
    %v597 = vunpack.c.l.b16 %v167
    %v598 = vunpack.c.h.b16 %v167
    %v599 = vunpack.c.l.b16 %v168
    %v600 = vunpack.c.h.b16 %v168
    %v601 = vunpack.c.l.b16 %v169
    %v602 = vunpack.c.h.b16 %v169
    %v603 = vunpack.c.l.b16 %v170
    %v604 = vunpack.c.h.b16 %v170
    %v605 = vunpack.c.l.b16 %v171
    %v606 = vunpack.c.h.b16 %v171
    %v607 = vunpack.c.l.b16 %v172
    %v608 = vunpack.c.h.b16 %v172
    %v609 = vunpack.c.l.b16 %v173
    %v610 = vunpack.c.h.b16 %v173
    %v611 = vunpack.c.l.b16 %v174
    %v612 = vunpack.c.h.b16 %v174
    %v613 = vunpack.c.l.b16 %v175
    %v614 = vunpack.c.h.b16 %v175
    %v615 = vunpack.c.l.b16 %v176
    %v616 = vunpack.c.h.b16 %v176
    %v617 = vunpack.c.l.b16 %v177
    %v618 = vunpack.c.h.b16 %v177
    %v619 = vunpack.c.l.b16 %v178
    %v620 = vunpack.c.h.b16 %v178
    %v621 = vunpack.c.l.b16 %v179
    %v622 = vunpack.c.h.b16 %v179
    %v623 = vunpack.c.l.b16 %v180
    %v624 = vunpack.c.h.b16 %v180
    %v625 = vunpack.c.l.b16 %v181
    %v626 = vunpack.c.h.b16 %v181
    %v627 = vunpack.c.l.b16 %v182
    %v628 = vunpack.c.h.b16 %v182
    %v629 = vunpack.c.l.b16 %v183
    %v630 = vunpack.c.h.b16 %v183
    %v631 = vunpack.c.l.b16 %v184
    %v632 = vunpack.c.h.b16 %v184
    %v633 = vunpack.c.l.b16 %v185
    %v634 = vunpack.c.h.b16 %v185
    %v635 = vunpack.c.l.b16 %v186
    %v636 = vunpack.c.h.b16 %v186
    %v637 = vunpack.c.l.b16 %v187
    %v638 = vunpack.c.h.b16 %v187
    %v639 = vunpack.c.l.b16 %v188
    %v640 = vunpack.c.h.b16 %v188
    %v641 = vunpack.c.l.b16 %v189
    %v642 = vunpack.c.h.b16 %v189
    %v643 = vunpack.c.l.b16 %v190
    %v644 = vunpack.c.h.b16 %v190
    %v645 = vunpack.c.l.b16 %v191
    %v646 = vunpack.c.h.b16 %v191
    %v647 = vunpack.c.l.b16 %v192
    %v648 = vunpack.c.h.b16 %v192
    %v649 = vunpack.c.l.b16 %v193
    %v650 = vunpack.c.h.b16 %v193
    %v651 = vunpack.c.l.b16 %v194
    %v652 = vunpack.c.h.b16 %v194
    %v653 = vunpack.c.l.b16 %v195
    %v654 = vunpack.c.h.b16 %v195
    %v655 = vunpack.c.l.b16 %v196
    %v656 = vunpack.c.h.b16 %v196
    %v657 = vunpack.c.l.b16 %v197
    %v658 = vunpack.c.h.b16 %v197
    %v659 = vunpack.c.l.b16 %v198
    %v660 = vunpack.c.h.b16 %v198
    %v661 = vunpack.c.l.b16 %v199
    %v662 = vunpack.c.h.b16 %v199
    %v663 = vunpack.c.l.b16 %v200
    %v664 = vunpack.c.h.b16 %v200
    %v665 = vunpack.c.l.b16 %v201
    %v666 = vunpack.c.h.b16 %v201
    %v667 = vunpack.c.l.b16 %v202
    %v668 = vunpack.c.h.b16 %v202
    %v669 = vunpack.c.l.b16 %v203
    %v670 = vunpack.c.h.b16 %v203
    %v671 = vunpack.c.l.b16 %v204
    %v672 = vunpack.c.h.b16 %v204
    %v673 = vunpack.c.l.b16 %v205
    %v674 = vunpack.c.h.b16 %v205
    %v675 = vunpack.c.l.b16 %v206
    %v676 = vunpack.c.h.b16 %v206
    %v677 = vunpack.c.l.b16 %v207
    %v678 = vunpack.c.h.b16 %v207
    %v679 = vunpack.c.l.b16 %v208
    %v680 = vunpack.c.h.b16 %v208
    %v681 = vunpack.c.l.b16 %v209
    %v682 = vunpack.c.h.b16 %v209
    %v683 = vunpack.c.l.b16 %v210
    %v684 = vunpack.c.h.b16 %v210
    %v685 = vunpack.c.l.b16 %v211
    %v686 = vunpack.c.h.b16 %v211
    %v687 = vunpack.c.l.b16 %v212
    %v688 = vunpack.c.h.b16 %v212
    %v689 = vunpack.c.l.b16 %v213
    %v690 = vunpack.c.h.b16 %v213
    %v691 = vunpack.c.l.b16 %v214
    %v692 = vunpack.c.h.b16 %v214
    %v693 = vunpack.c.l.b16 %v215
    %v694 = vunpack.c.h.b16 %v215
    %v695 = vunpack.c.l.b16 %v216
    %v696 = vunpack.c.h.b16 %v216
    %v697 = vunpack.c.l.b16 %v217
    %v698 = vunpack.c.h.b16 %v217
    %v699 = vunpack.c.l.b16 %v218
    %v700 = vunpack.c.h.b16 %v218
    %v701 = vunpack.c.l.b16 %v219
    %v702 = vunpack.c.h.b16 %v219
    %v703 = vunpack.c.l.b16 %v220
    %v704 = vunpack.c.h.b16 %v220
    %v705 = vunpack.c.l.b16 %v221
    %v706 = vunpack.c.h.b16 %v221
    %v707 = vunpack.c.l.b16 %v222
    %v708 = vunpack.c.h.b16 %v222
    %v709 = vunpack.c.l.b16 %v223
    %v710 = vunpack.c.h.b16 %v223
    %v711 = vunpack.c.l.b16 %v224
    %v712 = vunpack.c.h.b16 %v224
    %v713 = vunpack.c.l.b16 %v225
    %v714 = vunpack.c.h.b16 %v225
    %v715 = vunpack.c.l.b16 %v226
    %v716 = vunpack.c.h.b16 %v226
    %v717 = vunpack.c.l.b16 %v227
    %v718 = vunpack.c.h.b16 %v227
    %v719 = vunpack.c.l.b16 %v228
    %v720 = vunpack.c.h.b16 %v228
    %v721 = vunpack.c.l.b16 %v229
    %v722 = vunpack.c.h.b16 %v229
    %v723 = vunpack.c.l.b16 %v230
    %v724 = vunpack.c.h.b16 %v230
    %v725 = vunpack.c.l.b16 %v231
    %v726 = vunpack.c.h.b16 %v231
    %v727 = vunpack.c.l.b16 %v232
    %v728 = vunpack.c.h.b16 %v232
    %v729 = vunpack.c.l.b16 %v233
    %v730 = vunpack.c.h.b16 %v233
    %v731 = vunpack.c.l.b16 %v234
    %v732 = vunpack.c.h.b16 %v234
    %v733 = vunpack.c.l.b16 %v235
    %v734 = vunpack.c.h.b16 %v235
    %v735 = vunpack.c.l.b16 %v236
    %v736 = vunpack.c.h.b16 %v236
    %v737 = vunpack.c.l.b16 %v237
    %v738 = vunpack.c.h.b16 %v237
    %v739 = vunpack.c.l.b16 %v238
    %v740 = vunpack.c.h.b16 %v238
    %v741 = vunpack.c.l.b16 %v239
    %v742 = vunpack.c.h.b16 %v239
    %v743 = vunpack.c.l.b16 %v240
    %v744 = vunpack.c.h.b16 %v240
    %v745 = vunpack.c.l.b16 %v241
    %v746 = vunpack.c.h.b16 %v241
    %v747 = vunpack.c.l.b16 %v242
    %v748 = vunpack.c.h.b16 %v242
    %v749 = vunpack.c.l.b16 %v243
    %v750 = vunpack.c.h.b16 %v243
    %v751 = vunpack.c.l.b16 %v244
    %v752 = vunpack.c.h.b16 %v244
    %v753 = vunpack.c.l.b16 %v245
    %v754 = vunpack.c.h.b16 %v245
    %v755 = vunpack.c.l.b16 %v246
    %v756 = vunpack.c.h.b16 %v246
    %v757 = vunpack.c.l.b16 %v247
    %v758 = vunpack.c.h.b16 %v247
    %v759 = vunpack.c.l.b16 %v248
    %v760 = vunpack.c.h.b16 %v248
    %v761 = vunpack.c.l.b16 %v249
    %v762 = vunpack.c.h.b16 %v249
    %v763 = vunpack.c.l.b16 %v250
    %v764 = vunpack.c.h.b16 %v250
    %v765 = vunpack.c.l.b16 %v251
    %v766 = vunpack.c.h.b16 %v251
    %v767 = vunpack.c.l.b16 %v252
    %v768 = vunpack.c.h.b16 %v252
    %v769 = vunpack.c.l.b16 %v253
    %v770 = vunpack.c.h.b16 %v253
    %v771 = vunpack.c.l.b16 %v254
    %v772 = vunpack.c.h.b16 %v254
    %v773 = vunpack.c.l.b16 %v255
    %v774 = vunpack.c.h.b16 %v255
    %v775 = vunpack.c.l.b16 %v256
    %v776 = vunpack.c.h.b16 %v256
    %v777 = vunpack.c.l.b16 %v257
    %v778 = vunpack.c.h.b16 %v257
    %v779 = vunpack.c.l.b16 %v258
    %v780 = vunpack.c.h.b16 %v258
    %v781 = vunpack.c.l.b16 %v259
    %v782 = vunpack.c.h.b16 %v259
    %v783 = vunpack.c.l.b16 %v260
    %v784 = vunpack.c.h.b16 %v260
    %v785 = vunpack.c.l.b16 %v261
    %v786 = vunpack.c.h.b16 %v261
    %v787 = vunpack.c.l.b16 %v262
    %v788 = vunpack.c.h.b16 %v262
    %v789 = vunpack.c.l.b16 %v263
    %v790 = vunpack.c.h.b16 %v263
    %v791 = vunpack.c.l.b16 %v264
    %v792 = vunpack.c.h.b16 %v264
    %v793 = vunpack.c.l.b16 %v265
    %v794 = vunpack.c.h.b16 %v265
    %v795 = vunpack.c.l.b16 %v266
    %v796 = vunpack.c.h.b16 %v266
    %v797 = vunpack.c.l.b16 %v267
    %v798 = vunpack.c.h.b16 %v267
    %v799 = vunpack.c.l.b16 %v268
    %v800 = vunpack.c.h.b16 %v268
    %v801 = vunpack.c.l.b16 %v269
    %v802 = vunpack.c.h.b16 %v269
    %v803 = vunpack.c.l.b16 %v270
    %v804 = vunpack.c.h.b16 %v270
    %v805 = vunpack.c.l.b16 %v271
    %v806 = vunpack.c.h.b16 %v271
    %v807 = vunpack.c.l.b16 %v272
    %v808 = vunpack.c.h.b16 %v272
    %v809 = vunpack.c.l.b16 %v273
    %v810 = vunpack.c.h.b16 %v273
    %v811 = vunpack.c.l.b16 %v274
    %v812 = vunpack.c.h.b16 %v274
    %v813 = vunpack.c.l.b16 %v275
    %v814 = vunpack.c.h.b16 %v275
    %v815 = vunpack.c.l.b16 %v276
    %v816 = vunpack.c.h.b16 %v276
    %v817 = vunpack.c.l.b16 %v277
    %v818 = vunpack.c.h.b16 %v277
    %v819 = vunpack.c.l.b16 %v278
    %v820 = vunpack.c.h.b16 %v278
    %v821 = vunpack.c.l.b16 %v279
    %v822 = vunpack.c.h.b16 %v279
    %v823 = vunpack.c.l.b16 %v280
    %v824 = vunpack.c.h.b16 %v280
    %v825 = vunpack.c.l.b16 %v281
    %v826 = vunpack.c.h.b16 %v281
    %v827 = vunpack.c.l.b16 %v282
    %v828 = vunpack.c.h.b16 %v282
    %v829 = vunpack.c.l.b16 %v283
    %v830 = vunpack.c.h.b16 %v283
    %v831 = vunpack.c.l.b16 %v284
    %v832 = vunpack.c.h.b16 %v284
    %v833 = vunpack.c.l.b16 %v285
    %v834 = vunpack.c.h.b16 %v285
    %v835 = vunpack.c.l.b16 %v286
    %v836 = vunpack.c.h.b16 %v286
    %v837 = vunpack.c.l.b16 %v287
    %v838 = vunpack.c.h.b16 %v287
    %v839 = vunpack.c.l.b16 %v288
    %v840 = vunpack.c.h.b16 %v288
    %v841 = vunpack.c.l.b16 %v289
    %v842 = vunpack.c.h.b16 %v289
    %v843 = vunpack.c.l.b16 %v290
    %v844 = vunpack.c.h.b16 %v290
    %v845 = vunpack.c.l.b16 %v291
    %v846 = vunpack.c.h.b16 %v291
    %v847 = vunpack.c.l.b16 %v292
    %v848 = vunpack.c.h.b16 %v292
    %v849 = vunpack.c.l.b16 %v293
    %v850 = vunpack.c.h.b16 %v293
    %v851 = vunpack.c.l.b16 %v294
    %v852 = vunpack.c.h.b16 %v294
    %v853 = vunpack.c.l.b16 %v295
    %v854 = vunpack.c.h.b16 %v295
    %v855 = vunpack.c.l.b16 %v296
    %v856 = vunpack.c.h.b16 %v296
    %v857 = vunpack.c.l.b16 %v297
    %v858 = vunpack.c.h.b16 %v297
    %v859 = vunpack.c.l.b16 %v298
    %v860 = vunpack.c.h.b16 %v298
    %v861 = vunpack.c.l.b16 %v299
    %v862 = vunpack.c.h.b16 %v299
    %v863 = vunpack.c.l.b16 %v300
    %v864 = vunpack.c.h.b16 %v300
    %v865 = vunpack.c.l.b16 %v301
    %v866 = vunpack.c.h.b16 %v301
    %v867 = vunpack.c.l.b16 %v302
    %v868 = vunpack.c.h.b16 %v302
    %v869 = vunpack.c.l.b16 %v303
    %v870 = vunpack.c.h.b16 %v303
    %v871 = vunpack.c.l.b16 %v304
    %v872 = vunpack.c.h.b16 %v304
    %v873 = vunpack.c.l.b16 %v305
    %v874 = vunpack.c.h.b16 %v305
    %v875 = vunpack.c.l.b16 %v306
    %v876 = vunpack.c.h.b16 %v306
    %v877 = vunpack.c.l.b16 %v307
    %v878 = vunpack.c.h.b16 %v307
    %v879 = vunpack.c.l.b16 %v308
    %v880 = vunpack.c.h.b16 %v308
    %v881 = vunpack.c.l.b16 %v309
    %v882 = vunpack.c.h.b16 %v309
    %v883 = vunpack.c.l.b16 %v310
    %v884 = vunpack.c.h.b16 %v310
    %v885 = vunpack.c.l.b16 %v311
    %v886 = vunpack.c.h.b16 %v311
    %v887 = vunpack.c.l.b16 %v312
    %v888 = vunpack.c.h.b16 %v312
    %v889 = vunpack.c.l.b16 %v313
    %v890 = vunpack.c.h.b16 %v313
    %v891 = vunpack.c.l.b16 %v314
    %v892 = vunpack.c.h.b16 %v314
    %v893 = vunpack.c.l.b16 %v315
    %v894 = vunpack.c.h.b16 %v315
    %v895 = vunpack.c.l.b16 %v316
    %v896 = vunpack.c.h.b16 %v316
    %v897 = vunpack.c.l.b16 %v317
    %v898 = vunpack.c.h.b16 %v317
    %v899 = vunpack.c.l.b16 %v318
    %v900 = vunpack.c.h.b16 %v318
    %v901 = vunpack.c.l.b16 %v319
    %v902 = vunpack.c.h.b16 %v319
    %v903 = vunpack.c.l.b16 %v320
    %v904 = vunpack.c.h.b16 %v320
    %v905 = vunpack.c.l.b16 %v321
    %v906 = vunpack.c.h.b16 %v321
    %v907 = vunpack.c.l.b16 %v322
    %v908 = vunpack.c.h.b16 %v322
    %v909 = vunpack.c.l.b16 %v323
    %v910 = vunpack.c.h.b16 %v323
    %v911 = vunpack.c.l.b16 %v324
    %v912 = vunpack.c.h.b16 %v324
    %v913 = vunpack.c.l.b16 %v325
    %v914 = vunpack.c.h.b16 %v325
    %v915 = vunpack.c.l.b16 %v326
    %v916 = vunpack.c.h.b16 %v326
    %v917 = vunpack.c.l.b16 %v327
    %v918 = vunpack.c.h.b16 %v327
    %v919 = vunpack.c.l.b16 %v328
    %v920 = vunpack.c.h.b16 %v328
    %v921 = vunpack.c.l.b16 %v329
    %v922 = vunpack.c.h.b16 %v329
    %v923 = vunpack.c.l.b16 %v330
    %v924 = vunpack.c.h.b16 %v330
    %v925 = vunpack.c.l.b16 %v331
    %v926 = vunpack.c.h.b16 %v331
    %v927 = vunpack.c.l.b16 %v332
    %v928 = vunpack.c.h.b16 %v332
    %v929 = vunpack.c.l.b16 %v333
    %v930 = vunpack.c.h.b16 %v333
    %v931 = vunpack.c.l.b16 %v334
    %v932 = vunpack.c.h.b16 %v334
    %v933 = vpack.c.b16 %v545, %v541
    %v934 = vpack.c.b16 %v546, %v542
    %v935 = vpack.c.b16 %v547, %v543
    %v936 = vpack.c.b16 %v548, %v544
    %v937 = vpack.c.b16 %v553, %v549
    %v938 = vpack.c.b16 %v554, %v550
    %v939 = vpack.c.b16 %v555, %v551
    %v940 = vpack.c.b16 %v556, %v552
    %v941 = vpack.c.b16 %v561, %v557
    %v942 = vpack.c.b16 %v562, %v558
    %v943 = vpack.c.b16 %v563, %v559
    %v944 = vpack.c.b16 %v564, %v560
    %v945 = vpack.c.b16 %v569, %v565
    %v946 = vpack.c.b16 %v570, %v566
    %v947 = vpack.c.b16 %v571, %v567
    %v948 = vpack.c.b16 %v572, %v568
    %v949 = vpack.c.b16 %v577, %v573
    %v950 = vpack.c.b16 %v578, %v574
    %v951 = vpack.c.b16 %v579, %v575
    %v952 = vpack.c.b16 %v580, %v576
    %v953 = vpack.c.b16 %v585, %v581
    %v954 = vpack.c.b16 %v586, %v582
    %v955 = vpack.c.b16 %v587, %v583
    %v956 = vpack.c.b16 %v588, %v584
    %v957 = vpack.c.b16 %v593, %v589
    %v958 = vpack.c.b16 %v594, %v590
    %v959 = vpack.c.b16 %v595, %v591
    %v960 = vpack.c.b16 %v596, %v592
    %v961 = vpack.c.b16 %v601, %v597
    %v962 = vpack.c.b16 %v602, %v598
    %v963 = vpack.c.b16 %v603, %v599
    %v964 = vpack.c.b16 %v604, %v600
    %v965 = vpack.c.b16 %v609, %v605
    %v966 = vpack.c.b16 %v610, %v606
    %v967 = vpack.c.b16 %v611, %v607
    %v968 = vpack.c.b16 %v612, %v608
    %v969 = vpack.c.b16 %v617, %v613
    %v970 = vpack.c.b16 %v618, %v614
    %v971 = vpack.c.b16 %v619, %v615
    %v972 = vpack.c.b16 %v620, %v616
    %v973 = vpack.c.b16 %v625, %v621
    %v974 = vpack.c.b16 %v626, %v622
    %v975 = vpack.c.b16 %v627, %v623
    %v976 = vpack.c.b16 %v628, %v624
    %v977 = vpack.c.b16 %v633, %v629
    %v978 = vpack.c.b16 %v634, %v630
    %v979 = vpack.c.b16 %v635, %v631
    %v980 = vpack.c.b16 %v636, %v632
    %v981 = vpack.c.b16 %v641, %v637
    %v982 = vpack.c.b16 %v642, %v638
    %v983 = vpack.c.b16 %v643, %v639
    %v984 = vpack.c.b16 %v644, %v640
    %v985 = vpack.c.b16 %v649, %v645
    %v986 = vpack.c.b16 %v650, %v646
    %v987 = vpack.c.b16 %v651, %v647
    %v988 = vpack.c.b16 %v652, %v648
    %v989 = vpack.c.b16 %v657, %v653
    %v990 = vpack.c.b16 %v658, %v654
    %v991 = vpack.c.b16 %v659, %v655
    %v992 = vpack.c.b16 %v660, %v656
    %v993 = vpack.c.b16 %v665, %v661
    %v994 = vpack.c.b16 %v666, %v662
    %v995 = vpack.c.b16 %v667, %v663
    %v996 = vpack.c.b16 %v668, %v664
    %v997 = vpack.c.b16 %v673, %v669
    %v998 = vpack.c.b16 %v674, %v670
    %v999 = vpack.c.b16 %v675, %v671
    %v1000 = vpack.c.b16 %v676, %v672
    %v1001 = vpack.c.b16 %v681, %v677
    %v1002 = vpack.c.b16 %v682, %v678
    %v1003 = vpack.c.b16 %v683, %v679
    %v1004 = vpack.c.b16 %v684, %v680
    %v1005 = vpack.c.b16 %v689, %v685
    %v1006 = vpack.c.b16 %v690, %v686
    %v1007 = vpack.c.b16 %v691, %v687
    %v1008 = vpack.c.b16 %v692, %v688
    %v1009 = vpack.c.b16 %v697, %v693
    %v1010 = vpack.c.b16 %v698, %v694
    %v1011 = vpack.c.b16 %v699, %v695
    %v1012 = vpack.c.b16 %v700, %v696
    %v1013 = vpack.c.b16 %v705, %v701
    %v1014 = vpack.c.b16 %v706, %v702
    %v1015 = vpack.c.b16 %v707, %v703
    %v1016 = vpack.c.b16 %v708, %v704
    %v1017 = vpack.c.b16 %v713, %v709
    %v1018 = vpack.c.b16 %v714, %v710
    %v1019 = vpack.c.b16 %v715, %v711
    %v1020 = vpack.c.b16 %v716, %v712
    %v1021 = vpack.c.b16 %v721, %v717
    %v1022 = vpack.c.b16 %v722, %v718
    %v1023 = vpack.c.b16 %v723, %v719
    %v1024 = vpack.c.b16 %v724, %v720
    %v1025 = vpack.c.b16 %v729, %v725
    %v1026 = vpack.c.b16 %v730, %v726
    %v1027 = vpack.c.b16 %v731, %v727
    %v1028 = vpack.c.b16 %v732, %v728
    %v1029 = vpack.c.b16 %v737, %v733
    %v1030 = vpack.c.b16 %v738, %v734
    %v1031 = vpack.c.b16 %v739, %v735
    %v1032 = vpack.c.b16 %v740, %v736
    %v1033 = vpack.c.b16 %v745, %v741
    %v1034 = vpack.c.b16 %v746, %v742
    %v1035 = vpack.c.b16 %v747, %v743
    %v1036 = vpack.c.b16 %v748, %v744
    %v1037 = vpack.c.b16 %v753, %v749
    %v1038 = vpack.c.b16 %v754, %v750
    %v1039 = vpack.c.b16 %v755, %v751
    %v1040 = vpack.c.b16 %v756, %v752
    %v1041 = vpack.c.b16 %v761, %v757
    %v1042 = vpack.c.b16 %v762, %v758
    %v1043 = vpack.c.b16 %v763, %v759
    %v1044 = vpack.c.b16 %v764, %v760
    %v1045 = vpack.c.b16 %v769, %v765
    %v1046 = vpack.c.b16 %v770, %v766
    %v1047 = vpack.c.b16 %v771, %v767
    %v1048 = vpack.c.b16 %v772, %v768
    %v1049 = vpack.c.b16 %v777, %v773
    %v1050 = vpack.c.b16 %v778, %v774
    %v1051 = vpack.c.b16 %v779, %v775
    %v1052 = vpack.c.b16 %v780, %v776
    %v1053 = vpack.c.b16 %v785, %v781
    %v1054 = vpack.c.b16 %v786, %v782
    %v1055 = vpack.c.b16 %v787, %v783
    %v1056 = vpack.c.b16 %v788, %v784
    %v1057 = vpack.c.b16 %v793, %v789
    %v1058 = vpack.c.b16 %v794, %v790
    %v1059 = vpack.c.b16 %v795, %v791
    %v1060 = vpack.c.b16 %v796, %v792
    %v1061 = vpack.c.b16 %v801, %v797
    %v1062 = vpack.c.b16 %v802, %v798
    %v1063 = vpack.c.b16 %v803, %v799
    %v1064 = vpack.c.b16 %v804, %v800
    %v1065 = vpack.c.b16 %v809, %v805
    %v1066 = vpack.c.b16 %v810, %v806
    %v1067 = vpack.c.b16 %v811, %v807
    %v1068 = vpack.c.b16 %v812, %v808
    %v1069 = vpack.c.b16 %v817, %v813
    %v1070 = vpack.c.b16 %v818, %v814
    %v1071 = vpack.c.b16 %v819, %v815
    %v1072 = vpack.c.b16 %v820, %v816
    %v1073 = vpack.c.b16 %v825, %v821
    %v1074 = vpack.c.b16 %v826, %v822
    %v1075 = vpack.c.b16 %v827, %v823
    %v1076 = vpack.c.b16 %v828, %v824
    %v1077 = vpack.c.b16 %v833, %v829
    %v1078 = vpack.c.b16 %v834, %v830
    %v1079 = vpack.c.b16 %v835, %v831
    %v1080 = vpack.c.b16 %v836, %v832
    %v1081 = vpack.c.b16 %v841, %v837
    %v1082 = vpack.c.b16 %v842, %v838
    %v1083 = vpack.c.b16 %v843, %v839
    %v1084 = vpack.c.b16 %v844, %v840
    %v1085 = vpack.c.b16 %v849, %v845
    %v1086 = vpack.c.b16 %v850, %v846
    %v1087 = vpack.c.b16 %v851, %v847
    %v1088 = vpack.c.b16 %v852, %v848
    %v1089 = vpack.c.b16 %v857, %v853
    %v1090 = vpack.c.b16 %v858, %v854
    %v1091 = vpack.c.b16 %v859, %v855
    %v1092 = vpack.c.b16 %v860, %v856
    %v1093 = vpack.c.b16 %v865, %v861
    %v1094 = vpack.c.b16 %v866, %v862
    %v1095 = vpack.c.b16 %v867, %v863
    %v1096 = vpack.c.b16 %v868, %v864
    %v1097 = vpack.c.b16 %v873, %v869
    %v1098 = vpack.c.b16 %v874, %v870
    %v1099 = vpack.c.b16 %v875, %v871
    %v1100 = vpack.c.b16 %v876, %v872
    %v1101 = vpack.c.b16 %v881, %v877
    %v1102 = vpack.c.b16 %v882, %v878
    %v1103 = vpack.c.b16 %v883, %v879
    %v1104 = vpack.c.b16 %v884, %v880
    %v1105 = vpack.c.b16 %v889, %v885
    %v1106 = vpack.c.b16 %v890, %v886
    %v1107 = vpack.c.b16 %v891, %v887
    %v1108 = vpack.c.b16 %v892, %v888
    %v1109 = vpack.c.b16 %v897, %v893
    %v1110 = vpack.c.b16 %v898, %v894
    %v1111 = vpack.c.b16 %v899, %v895
    %v1112 = vpack.c.b16 %v900, %v896
    %v1113 = vpack.c.b16 %v905, %v901
    %v1114 = vpack.c.b16 %v906, %v902
    %v1115 = vpack.c.b16 %v907, %v903
    %v1116 = vpack.c.b16 %v908, %v904
    %v1117 = vpack.c.b16 %v913, %v909
    %v1118 = vpack.c.b16 %v914, %v910
    %v1119 = vpack.c.b16 %v915, %v911
    %v1120 = vpack.c.b16 %v916, %v912
    %v1121 = vpack.c.b16 %v921, %v917
    %v1122 = vpack.c.b16 %v922, %v918
    %v1123 = vpack.c.b16 %v923, %v919
    %v1124 = vpack.c.b16 %v924, %v920
    %v1125 = vpack.c.b16 %v929, %v925
    %v1126 = vpack.c.b16 %v930, %v926
    %v1127 = vpack.c.b16 %v931, %v927
    %v1128 = vpack.c.b16 %v932, %v928
    %vm1325 = vcmask 130048
    %v1327 = vsel %vm1325, %v138, 0
    %1329 = vmatpush.bf16.msra.mxu0 %v961
    %1330 = vmatpush.bf16.msra.mxu0 %v957
    %1331 = vmatpush.bf16.msra.mxu0 %v953
    %1332 = vmatpush.bf16.msra.mxu0 %v949
    %1333 = vmatpush.bf16.msra.mxu0 %v945
    %1334 = vmatpush.bf16.msra.mxu0 %v941
    %1335 = vmatpush.bf16.msra.mxu0 %v937
    %1336 = vmatpush.bf16.msra.mxu0 %v933
    %1337 = vmatmul.bf16.gmra.mxu0 %v132
    %v1338 = vpop.f32.mrf.mxu0
    %v1339 = vadd.f32 %v337, %v1338
    %v1340 = vpop.f32.mrf.mxu0
    %v1341 = vadd.f32 %v337, %v1340
    %1342 = vdwg.mxu0
    %1343 = vmatpush.bf16.msra.mxu0 %v993
    %1344 = vmatpush.bf16.msra.mxu0 %v989
    %1345 = vmatpush.bf16.msra.mxu0 %v985
    %1346 = vmatpush.bf16.msra.mxu0 %v981
    %1347 = vmatpush.bf16.msra.mxu0 %v977
    %1348 = vmatpush.bf16.msra.mxu0 %v973
    %1349 = vmatpush.bf16.msra.mxu0 %v969
    %1350 = vmatpush.bf16.msra.mxu0 %v965
    %1351 = vmatmul.bf16.gmra.mxu0 %v133
    %v1352 = vpop.f32.mrf.mxu0
    %v1353 = vadd.f32 %v1339, %v1352
    %v1354 = vpop.f32.mrf.mxu0
    %v1355 = vadd.f32 %v1341, %v1354
    %1356 = vdwg.mxu0
    %1357 = vmatpush.bf16.msra.mxu0 %v1025
    %1358 = vmatpush.bf16.msra.mxu0 %v1021
    %1359 = vmatpush.bf16.msra.mxu0 %v1017
    %1360 = vmatpush.bf16.msra.mxu0 %v1013
    %1361 = vmatpush.bf16.msra.mxu0 %v1009
    %1362 = vmatpush.bf16.msra.mxu0 %v1005
    %1363 = vmatpush.bf16.msra.mxu0 %v1001
    %1364 = vmatpush.bf16.msra.mxu0 %v997
    %1365 = vmatmul.bf16.gmra.mxu0 %v134
    %v1366 = vpop.f32.mrf.mxu0
    %v1367 = vadd.f32 %v1353, %v1366
    %v1368 = vpop.f32.mrf.mxu0
    %v1369 = vadd.f32 %v1355, %v1368
    %1370 = vdwg.mxu0
    %1371 = vmatpush.bf16.msra.mxu0 %v1057
    %1372 = vmatpush.bf16.msra.mxu0 %v1053
    %1373 = vmatpush.bf16.msra.mxu0 %v1049
    %1374 = vmatpush.bf16.msra.mxu0 %v1045
    %1375 = vmatpush.bf16.msra.mxu0 %v1041
    %1376 = vmatpush.bf16.msra.mxu0 %v1037
    %1377 = vmatpush.bf16.msra.mxu0 %v1033
    %1378 = vmatpush.bf16.msra.mxu0 %v1029
    %1379 = vmatmul.bf16.gmra.mxu0 %v135
    %v1380 = vpop.f32.mrf.mxu0
    %v1381 = vadd.f32 %v1367, %v1380
    %v1382 = vpop.f32.mrf.mxu0
    %v1383 = vadd.f32 %v1369, %v1382
    %1384 = vdwg.mxu0
    %1385 = vmatpush.bf16.msra.mxu0 %v1089
    %1386 = vmatpush.bf16.msra.mxu0 %v1085
    %1387 = vmatpush.bf16.msra.mxu0 %v1081
    %1388 = vmatpush.bf16.msra.mxu0 %v1077
    %1389 = vmatpush.bf16.msra.mxu0 %v1073
    %1390 = vmatpush.bf16.msra.mxu0 %v1069
    %1391 = vmatpush.bf16.msra.mxu0 %v1065
    %1392 = vmatpush.bf16.msra.mxu0 %v1061
    %1393 = vmatmul.bf16.gmra.mxu0 %v136
    %v1394 = vpop.f32.mrf.mxu0
    %v1395 = vadd.f32 %v1381, %v1394
    %v1396 = vpop.f32.mrf.mxu0
    %v1397 = vadd.f32 %v1383, %v1396
    %1398 = vdwg.mxu0
    %1399 = vmatpush.bf16.msra.mxu0 %v1121
    %1400 = vmatpush.bf16.msra.mxu0 %v1117
    %1401 = vmatpush.bf16.msra.mxu0 %v1113
    %1402 = vmatpush.bf16.msra.mxu0 %v1109
    %1403 = vmatpush.bf16.msra.mxu0 %v1105
    %1404 = vmatpush.bf16.msra.mxu0 %v1101
    %1405 = vmatpush.bf16.msra.mxu0 %v1097
    %1406 = vmatpush.bf16.msra.mxu0 %v1093
    %1407 = vmatmul.bf16.gmra.mxu0 %v137
    %v1408 = vpop.f32.mrf.mxu0
    %v1409 = vadd.f32 %v1395, %v1408
    %v1410 = vpop.f32.mrf.mxu0
    %v1411 = vadd.f32 %v1397, %v1410
    %1412 = vdwg.mxu0
    %1413 = vmatpush.bf16.msra.mxu0 0
    %1414 = vmatpush.bf16.msra.mxu0 0
    %1415 = vmatpush.bf16.msra.mxu0 0
    %1416 = vmatpush.bf16.msra.mxu0 0
    %1417 = vmatpush.bf16.msra.mxu0 0
    %1418 = vmatpush.bf16.msra.mxu0 0
    %1419 = vmatpush.bf16.msra.mxu0 0
    %1420 = vmatpush.bf16.msra.mxu0 %v1125
    %1421 = vmatmul.bf16.gmra.mxu0 %v1327
    %v1422 = vpop.f32.mrf.mxu0
    %v1423 = vadd.f32 %v1409, %v1422
    %v1424 = vpop.f32.mrf.mxu0
    %v1425 = vadd.f32 %v1411, %v1424
    %1426 = vdwg.mxu0
    %1427 = vmatpush.bf16.msra.mxu0 %v962
    %1428 = vmatpush.bf16.msra.mxu0 %v958
    %1429 = vmatpush.bf16.msra.mxu0 %v954
    %1430 = vmatpush.bf16.msra.mxu0 %v950
    %1431 = vmatpush.bf16.msra.mxu0 %v946
    %1432 = vmatpush.bf16.msra.mxu0 %v942
    %1433 = vmatpush.bf16.msra.mxu0 %v938
    %1434 = vmatpush.bf16.msra.mxu0 %v934
    %1435 = vmatmul.bf16.gmra.mxu0 %v132
    %v1436 = vpop.f32.mrf.mxu0
    %v1437 = vadd.f32 %v338, %v1436
    %v1438 = vpop.f32.mrf.mxu0
    %v1439 = vadd.f32 %v338, %v1438
    %1440 = vdwg.mxu0
    %1441 = vmatpush.bf16.msra.mxu0 %v994
    %1442 = vmatpush.bf16.msra.mxu0 %v990
    %1443 = vmatpush.bf16.msra.mxu0 %v986
    %1444 = vmatpush.bf16.msra.mxu0 %v982
    %1445 = vmatpush.bf16.msra.mxu0 %v978
    %1446 = vmatpush.bf16.msra.mxu0 %v974
    %1447 = vmatpush.bf16.msra.mxu0 %v970
    %1448 = vmatpush.bf16.msra.mxu0 %v966
    %1449 = vmatmul.bf16.gmra.mxu0 %v133
    %v1450 = vpop.f32.mrf.mxu0
    %v1451 = vadd.f32 %v1437, %v1450
    %v1452 = vpop.f32.mrf.mxu0
    %v1453 = vadd.f32 %v1439, %v1452
    %1454 = vdwg.mxu0
    %1455 = vmatpush.bf16.msra.mxu0 %v1026
    %1456 = vmatpush.bf16.msra.mxu0 %v1022
    %1457 = vmatpush.bf16.msra.mxu0 %v1018
    %1458 = vmatpush.bf16.msra.mxu0 %v1014
    %1459 = vmatpush.bf16.msra.mxu0 %v1010
    %1460 = vmatpush.bf16.msra.mxu0 %v1006
    %1461 = vmatpush.bf16.msra.mxu0 %v1002
    %1462 = vmatpush.bf16.msra.mxu0 %v998
    %1463 = vmatmul.bf16.gmra.mxu0 %v134
    %v1464 = vpop.f32.mrf.mxu0
    %v1465 = vadd.f32 %v1451, %v1464
    %v1466 = vpop.f32.mrf.mxu0
    %v1467 = vadd.f32 %v1453, %v1466
    %1468 = vdwg.mxu0
    %1469 = vmatpush.bf16.msra.mxu0 %v1058
    %1470 = vmatpush.bf16.msra.mxu0 %v1054
    %1471 = vmatpush.bf16.msra.mxu0 %v1050
    %1472 = vmatpush.bf16.msra.mxu0 %v1046
    %1473 = vmatpush.bf16.msra.mxu0 %v1042
    %1474 = vmatpush.bf16.msra.mxu0 %v1038
    %1475 = vmatpush.bf16.msra.mxu0 %v1034
    %1476 = vmatpush.bf16.msra.mxu0 %v1030
    %1477 = vmatmul.bf16.gmra.mxu0 %v135
    %v1478 = vpop.f32.mrf.mxu0
    %v1479 = vadd.f32 %v1465, %v1478
    %v1480 = vpop.f32.mrf.mxu0
    %v1481 = vadd.f32 %v1467, %v1480
    %1482 = vdwg.mxu0
    %1483 = vmatpush.bf16.msra.mxu0 %v1090
    %1484 = vmatpush.bf16.msra.mxu0 %v1086
    %1485 = vmatpush.bf16.msra.mxu0 %v1082
    %1486 = vmatpush.bf16.msra.mxu0 %v1078
    %1487 = vmatpush.bf16.msra.mxu0 %v1074
    %1488 = vmatpush.bf16.msra.mxu0 %v1070
    %1489 = vmatpush.bf16.msra.mxu0 %v1066
    %1490 = vmatpush.bf16.msra.mxu0 %v1062
    %1491 = vmatmul.bf16.gmra.mxu0 %v136
    %v1492 = vpop.f32.mrf.mxu0
    %v1493 = vadd.f32 %v1479, %v1492
    %v1494 = vpop.f32.mrf.mxu0
    %v1495 = vadd.f32 %v1481, %v1494
    %1496 = vdwg.mxu0
    %1497 = vmatpush.bf16.msra.mxu0 %v1122
    %1498 = vmatpush.bf16.msra.mxu0 %v1118
    %1499 = vmatpush.bf16.msra.mxu0 %v1114
    %1500 = vmatpush.bf16.msra.mxu0 %v1110
    %1501 = vmatpush.bf16.msra.mxu0 %v1106
    %1502 = vmatpush.bf16.msra.mxu0 %v1102
    %1503 = vmatpush.bf16.msra.mxu0 %v1098
    %1504 = vmatpush.bf16.msra.mxu0 %v1094
    %1505 = vmatmul.bf16.gmra.mxu0 %v137
    %v1506 = vpop.f32.mrf.mxu0
    %v1507 = vadd.f32 %v1493, %v1506
    %v1508 = vpop.f32.mrf.mxu0
    %v1509 = vadd.f32 %v1495, %v1508
    %1510 = vdwg.mxu0
    %1511 = vmatpush.bf16.msra.mxu0 0
    %1512 = vmatpush.bf16.msra.mxu0 0
    %1513 = vmatpush.bf16.msra.mxu0 0
    %1514 = vmatpush.bf16.msra.mxu0 0
    %1515 = vmatpush.bf16.msra.mxu0 0
    %1516 = vmatpush.bf16.msra.mxu0 0
    %1517 = vmatpush.bf16.msra.mxu0 0
    %1518 = vmatpush.bf16.msra.mxu0 %v1126
    %1519 = vmatmul.bf16.gmra.mxu0 %v1327
    %v1520 = vpop.f32.mrf.mxu0
    %v1521 = vadd.f32 %v1507, %v1520
    %v1522 = vpop.f32.mrf.mxu0
    %v1523 = vadd.f32 %v1509, %v1522
    %1524 = vdwg.mxu0
    %1525 = vmatpush.bf16.msra.mxu0 %v963
    %1526 = vmatpush.bf16.msra.mxu0 %v959
    %1527 = vmatpush.bf16.msra.mxu0 %v955
    %1528 = vmatpush.bf16.msra.mxu0 %v951
    %1529 = vmatpush.bf16.msra.mxu0 %v947
    %1530 = vmatpush.bf16.msra.mxu0 %v943
    %1531 = vmatpush.bf16.msra.mxu0 %v939
    %1532 = vmatpush.bf16.msra.mxu0 %v935
    %1533 = vmatmul.bf16.gmra.mxu0 %v132
    %v1534 = vpop.f32.mrf.mxu0
    %v1535 = vadd.f32 %v339, %v1534
    %v1536 = vpop.f32.mrf.mxu0
    %v1537 = vadd.f32 %v339, %v1536
    %1538 = vdwg.mxu0
    %1539 = vmatpush.bf16.msra.mxu0 %v995
    %1540 = vmatpush.bf16.msra.mxu0 %v991
    %1541 = vmatpush.bf16.msra.mxu0 %v987
    %1542 = vmatpush.bf16.msra.mxu0 %v983
    %1543 = vmatpush.bf16.msra.mxu0 %v979
    %1544 = vmatpush.bf16.msra.mxu0 %v975
    %1545 = vmatpush.bf16.msra.mxu0 %v971
    %1546 = vmatpush.bf16.msra.mxu0 %v967
    %1547 = vmatmul.bf16.gmra.mxu0 %v133
    %v1548 = vpop.f32.mrf.mxu0
    %v1549 = vadd.f32 %v1535, %v1548
    %v1550 = vpop.f32.mrf.mxu0
    %v1551 = vadd.f32 %v1537, %v1550
    %1552 = vdwg.mxu0
    %1553 = vmatpush.bf16.msra.mxu0 %v1027
    %1554 = vmatpush.bf16.msra.mxu0 %v1023
    %1555 = vmatpush.bf16.msra.mxu0 %v1019
    %1556 = vmatpush.bf16.msra.mxu0 %v1015
    %1557 = vmatpush.bf16.msra.mxu0 %v1011
    %1558 = vmatpush.bf16.msra.mxu0 %v1007
    %1559 = vmatpush.bf16.msra.mxu0 %v1003
    %1560 = vmatpush.bf16.msra.mxu0 %v999
    %1561 = vmatmul.bf16.gmra.mxu0 %v134
    %v1562 = vpop.f32.mrf.mxu0
    %v1563 = vadd.f32 %v1549, %v1562
    %v1564 = vpop.f32.mrf.mxu0
    %v1565 = vadd.f32 %v1551, %v1564
    %1566 = vdwg.mxu0
    %1567 = vmatpush.bf16.msra.mxu0 %v1059
    %1568 = vmatpush.bf16.msra.mxu0 %v1055
    %1569 = vmatpush.bf16.msra.mxu0 %v1051
    %1570 = vmatpush.bf16.msra.mxu0 %v1047
    %1571 = vmatpush.bf16.msra.mxu0 %v1043
    %1572 = vmatpush.bf16.msra.mxu0 %v1039
    %1573 = vmatpush.bf16.msra.mxu0 %v1035
    %1574 = vmatpush.bf16.msra.mxu0 %v1031
    %1575 = vmatmul.bf16.gmra.mxu0 %v135
    %v1576 = vpop.f32.mrf.mxu0
    %v1577 = vadd.f32 %v1563, %v1576
    %v1578 = vpop.f32.mrf.mxu0
    %v1579 = vadd.f32 %v1565, %v1578
    %1580 = vdwg.mxu0
    %1581 = vmatpush.bf16.msra.mxu0 %v1091
    %1582 = vmatpush.bf16.msra.mxu0 %v1087
    %1583 = vmatpush.bf16.msra.mxu0 %v1083
    %1584 = vmatpush.bf16.msra.mxu0 %v1079
    %1585 = vmatpush.bf16.msra.mxu0 %v1075
    %1586 = vmatpush.bf16.msra.mxu0 %v1071
    %1587 = vmatpush.bf16.msra.mxu0 %v1067
    %1588 = vmatpush.bf16.msra.mxu0 %v1063
    %1589 = vmatmul.bf16.gmra.mxu0 %v136
    %v1590 = vpop.f32.mrf.mxu0
    %v1591 = vadd.f32 %v1577, %v1590
    %v1592 = vpop.f32.mrf.mxu0
    %v1593 = vadd.f32 %v1579, %v1592
    %1594 = vdwg.mxu0
    %1595 = vmatpush.bf16.msra.mxu0 %v1123
    %1596 = vmatpush.bf16.msra.mxu0 %v1119
    %1597 = vmatpush.bf16.msra.mxu0 %v1115
    %1598 = vmatpush.bf16.msra.mxu0 %v1111
    %1599 = vmatpush.bf16.msra.mxu0 %v1107
    %1600 = vmatpush.bf16.msra.mxu0 %v1103
    %1601 = vmatpush.bf16.msra.mxu0 %v1099
    %1602 = vmatpush.bf16.msra.mxu0 %v1095
    %1603 = vmatmul.bf16.gmra.mxu0 %v137
    %v1604 = vpop.f32.mrf.mxu0
    %v1605 = vadd.f32 %v1591, %v1604
    %v1606 = vpop.f32.mrf.mxu0
    %v1607 = vadd.f32 %v1593, %v1606
    %1608 = vdwg.mxu0
    %1609 = vmatpush.bf16.msra.mxu0 0
    %1610 = vmatpush.bf16.msra.mxu0 0
    %1611 = vmatpush.bf16.msra.mxu0 0
    %1612 = vmatpush.bf16.msra.mxu0 0
    %1613 = vmatpush.bf16.msra.mxu0 0
    %1614 = vmatpush.bf16.msra.mxu0 0
    %1615 = vmatpush.bf16.msra.mxu0 0
    %1616 = vmatpush.bf16.msra.mxu0 %v1127
    %1617 = vmatmul.bf16.gmra.mxu0 %v1327
    %v1618 = vpop.f32.mrf.mxu0
    %v1619 = vadd.f32 %v1605, %v1618
    %v1620 = vpop.f32.mrf.mxu0
    %v1621 = vadd.f32 %v1607, %v1620
    %1622 = vdwg.mxu0
    %1623 = vmatpush.bf16.msra.mxu0 %v964
    %1624 = vmatpush.bf16.msra.mxu0 %v960
    %1625 = vmatpush.bf16.msra.mxu0 %v956
    %1626 = vmatpush.bf16.msra.mxu0 %v952
    %1627 = vmatpush.bf16.msra.mxu0 %v948
    %1628 = vmatpush.bf16.msra.mxu0 %v944
    %1629 = vmatpush.bf16.msra.mxu0 %v940
    %1630 = vmatpush.bf16.msra.mxu0 %v936
    %1631 = vmatmul.bf16.gmra.mxu0 %v132
    %v1632 = vpop.f32.mrf.mxu0
    %v1633 = vadd.f32 %v340, %v1632
    %v1634 = vpop.f32.mrf.mxu0
    %v1635 = vadd.f32 %v340, %v1634
    %1636 = vdwg.mxu0
    %1637 = vmatpush.bf16.msra.mxu0 %v996
    %1638 = vmatpush.bf16.msra.mxu0 %v992
    %1639 = vmatpush.bf16.msra.mxu0 %v988
    %1640 = vmatpush.bf16.msra.mxu0 %v984
    %1641 = vmatpush.bf16.msra.mxu0 %v980
    %1642 = vmatpush.bf16.msra.mxu0 %v976
    %1643 = vmatpush.bf16.msra.mxu0 %v972
    %1644 = vmatpush.bf16.msra.mxu0 %v968
    %1645 = vmatmul.bf16.gmra.mxu0 %v133
    %v1646 = vpop.f32.mrf.mxu0
    %v1647 = vadd.f32 %v1633, %v1646
    %v1648 = vpop.f32.mrf.mxu0
    %v1649 = vadd.f32 %v1635, %v1648
    %1650 = vdwg.mxu0
    %1651 = vmatpush.bf16.msra.mxu0 %v1028
    %1652 = vmatpush.bf16.msra.mxu0 %v1024
    %1653 = vmatpush.bf16.msra.mxu0 %v1020
    %1654 = vmatpush.bf16.msra.mxu0 %v1016
    %1655 = vmatpush.bf16.msra.mxu0 %v1012
    %1656 = vmatpush.bf16.msra.mxu0 %v1008
    %1657 = vmatpush.bf16.msra.mxu0 %v1004
    %1658 = vmatpush.bf16.msra.mxu0 %v1000
    %1659 = vmatmul.bf16.gmra.mxu0 %v134
    %v1660 = vpop.f32.mrf.mxu0
    %v1661 = vadd.f32 %v1647, %v1660
    %v1662 = vpop.f32.mrf.mxu0
    %v1663 = vadd.f32 %v1649, %v1662
    %1664 = vdwg.mxu0
    %1665 = vmatpush.bf16.msra.mxu0 %v1060
    %1666 = vmatpush.bf16.msra.mxu0 %v1056
    %1667 = vmatpush.bf16.msra.mxu0 %v1052
    %1668 = vmatpush.bf16.msra.mxu0 %v1048
    %1669 = vmatpush.bf16.msra.mxu0 %v1044
    %1670 = vmatpush.bf16.msra.mxu0 %v1040
    %1671 = vmatpush.bf16.msra.mxu0 %v1036
    %1672 = vmatpush.bf16.msra.mxu0 %v1032
    %1673 = vmatmul.bf16.gmra.mxu0 %v135
    %v1674 = vpop.f32.mrf.mxu0
    %v1675 = vadd.f32 %v1661, %v1674
    %v1676 = vpop.f32.mrf.mxu0
    %v1677 = vadd.f32 %v1663, %v1676
    %1678 = vdwg.mxu0
    %1679 = vmatpush.bf16.msra.mxu0 %v1092
    %1680 = vmatpush.bf16.msra.mxu0 %v1088
    %1681 = vmatpush.bf16.msra.mxu0 %v1084
    %1682 = vmatpush.bf16.msra.mxu0 %v1080
    %1683 = vmatpush.bf16.msra.mxu0 %v1076
    %1684 = vmatpush.bf16.msra.mxu0 %v1072
    %1685 = vmatpush.bf16.msra.mxu0 %v1068
    %1686 = vmatpush.bf16.msra.mxu0 %v1064
    %1687 = vmatmul.bf16.gmra.mxu0 %v136
    %v1688 = vpop.f32.mrf.mxu0
    %v1689 = vadd.f32 %v1675, %v1688
    %v1690 = vpop.f32.mrf.mxu0
    %v1691 = vadd.f32 %v1677, %v1690
    %1692 = vdwg.mxu0
    %1693 = vmatpush.bf16.msra.mxu0 %v1124
    %1694 = vmatpush.bf16.msra.mxu0 %v1120
    %1695 = vmatpush.bf16.msra.mxu0 %v1116
    %1696 = vmatpush.bf16.msra.mxu0 %v1112
    %1697 = vmatpush.bf16.msra.mxu0 %v1108
    %1698 = vmatpush.bf16.msra.mxu0 %v1104
    %1699 = vmatpush.bf16.msra.mxu0 %v1100
    %1700 = vmatpush.bf16.msra.mxu0 %v1096
    %1701 = vmatmul.bf16.gmra.mxu0 %v137
    %v1702 = vpop.f32.mrf.mxu0
    %v1703 = vadd.f32 %v1689, %v1702
    %v1704 = vpop.f32.mrf.mxu0
    %v1705 = vadd.f32 %v1691, %v1704
    %1706 = vdwg.mxu0
    %1707 = vmatpush.bf16.msra.mxu0 0
    %1708 = vmatpush.bf16.msra.mxu0 0
    %1709 = vmatpush.bf16.msra.mxu0 0
    %1710 = vmatpush.bf16.msra.mxu0 0
    %1711 = vmatpush.bf16.msra.mxu0 0
    %1712 = vmatpush.bf16.msra.mxu0 0
    %1713 = vmatpush.bf16.msra.mxu0 0
    %1714 = vmatpush.bf16.msra.mxu0 %v1128
    %1715 = vmatmul.bf16.gmra.mxu0 %v1327
    %v1716 = vpop.f32.mrf.mxu0
    %v1717 = vadd.f32 %v1703, %v1716
    %v1718 = vpop.f32.mrf.mxu0
    %v1719 = vadd.f32 %v1705, %v1718
    %1720 = vdwg.mxu0
    %v1721 = vmax.f32 %v1423, 0.0
    %v1722 = vmax.f32 %v1521, 0.0
    %v1723 = vmax.f32 %v1619, 0.0
    %v1724 = vmax.f32 %v1717, 0.0
    %v1725 = vmax.f32 %v1425, 0.0
    %v1726 = vmax.f32 %v1523, 0.0
    %v1727 = vmax.f32 %v1621, 0.0
    %v1728 = vmax.f32 %v1719, 0.0
    %v1729 = vpack.c.bf16 %v1725, %v1721
    %v1730 = vpack.c.bf16 %v1726, %v1722
    %v1731 = vpack.c.bf16 %v1727, %v1723
    %v1732 = vpack.c.bf16 %v1728, %v1724
    %v1733 = vld [vmem:[#allocation8] sm:$0xff]
    %v1734 = vld [vmem:[#allocation8 + $0x8] sm:$0xff]
    %v1735 = vld [vmem:[#allocation8 + $0x10] sm:$0xff]
    %v1736 = vld [vmem:[#allocation8 + $0x18] sm:$0xff]
    %v1737 = vld [vmem:[#allocation8 + $0x20] sm:$0xff]
    %v1738 = vld [vmem:[#allocation8 + $0x28] sm:$0xff]
    %v1739 = vld [vmem:[#allocation8 + $0x30] sm:$0xff]
    %v1740 = vld [vmem:[#allocation8 + $0x38] sm:$0xff]
    %v1741 = vld [vmem:[#allocation8 + $0x40] sm:$0xff]
    %v1742 = vld [vmem:[#allocation8 + $0x48] sm:$0xff]
    %v1743 = vld [vmem:[#allocation8 + $0x50] sm:$0xff]
    %v1744 = vld [vmem:[#allocation8 + $0x58] sm:$0xff]
    %v1745 = vld [vmem:[#allocation8 + $0x60] sm:$0xff]
    %v1746 = vld [vmem:[#allocation8 + $0x68] sm:$0xff]
    %v1747 = vld [vmem:[#allocation8 + $0x70] sm:$0xff]
    %v1748 = vld [vmem:[#allocation8 + $0x78] sm:$0xff]
    %v1749 = vld [vmem:[#allocation8 + $0x80] sm:$0xff]
    %v1750 = vld [vmem:[#allocation8 + $0x88] sm:$0xff]
    %v1751 = vld [vmem:[#allocation8 + $0x90] sm:$0xff]
    %v1752 = vld [vmem:[#allocation8 + $0x98] sm:$0xff]
    %v1753 = vld [vmem:[#allocation8 + $0xa0] sm:$0xff]
    %v1754 = vld [vmem:[#allocation8 + $0xa8] sm:$0xff]
    %v1755 = vld [vmem:[#allocation8 + $0xb0] sm:$0xff]
    %v1756 = vld [vmem:[#allocation8 + $0xb8] sm:$0xff]
    %v1757 = vld [vmem:[#allocation8 + $0xc0] sm:$0xff]
    %v1758 = vld [vmem:[#allocation8 + $0xc8] sm:$0xff]
    %v1759 = vld [vmem:[#allocation8 + $0xd0] sm:$0xff]
    %v1760 = vld [vmem:[#allocation8 + $0xd8] sm:$0xff]
    %v1761 = vld [vmem:[#allocation8 + $0xe0] sm:$0xff]
    %v1762 = vld [vmem:[#allocation8 + $0xe8] sm:$0xff]
    %v1763 = vld [vmem:[#allocation8 + $0xf0] sm:$0xff]
    %v1764 = vld [vmem:[#allocation8 + $0xf8] sm:$0xff]
    %v1765 = vld [vmem:[#allocation8 + $0x100] sm:$0xff]
    %v1766 = vld [vmem:[#allocation8 + $0x108] sm:$0xff]
    %v1767 = vld [vmem:[#allocation8 + $0x110] sm:$0xff]
    %v1768 = vld [vmem:[#allocation8 + $0x118] sm:$0xff]
    %v1769 = vld [vmem:[#allocation8 + $0x120] sm:$0xff]
    %v1770 = vld [vmem:[#allocation8 + $0x128] sm:$0xff]
    %v1771 = vld [vmem:[#allocation8 + $0x130] sm:$0xff]
    %v1772 = vld [vmem:[#allocation8 + $0x138] sm:$0xff]
    %v1773 = vld [vmem:[#allocation8 + $0x140] sm:$0xff]
    %v1774 = vld [vmem:[#allocation8 + $0x148] sm:$0xff]
    %v1775 = vld [vmem:[#allocation8 + $0x150] sm:$0xff]
    %v1776 = vld [vmem:[#allocation8 + $0x158] sm:$0xff]
    %v1777 = vld [vmem:[#allocation8 + $0x160] sm:$0xff]
    %v1778 = vld [vmem:[#allocation8 + $0x168] sm:$0xff]
    %v1779 = vld [vmem:[#allocation8 + $0x170] sm:$0xff]
    %v1780 = vld [vmem:[#allocation8 + $0x178] sm:$0xff]
    %v1781 = vld [vmem:[#allocation8 + $0x180] sm:$0xff]
    %v1782 = vld [vmem:[#allocation8 + $0x188] sm:$0xff]
    %v1783 = vld [vmem:[#allocation8 + $0x190] sm:$0xff]
    %v1784 = vld [vmem:[#allocation8 + $0x198] sm:$0xff]
    %v1785 = vld [vmem:[#allocation8 + $0x1a0] sm:$0xff]
    %v1786 = vld [vmem:[#allocation8 + $0x1a8] sm:$0xff]
    %v1787 = vld [vmem:[#allocation8 + $0x1b0] sm:$0xff]
    %v1788 = vld [vmem:[#allocation8 + $0x1b8] sm:$0xff]
    %v1789 = vld [vmem:[#allocation8 + $0x1c0] sm:$0xff]
    %v1790 = vld [vmem:[#allocation8 + $0x1c8] sm:$0xff]
    %v1791 = vld [vmem:[#allocation8 + $0x1d0] sm:$0xff]
    %v1792 = vld [vmem:[#allocation8 + $0x1d8] sm:$0xff]
    %v1793 = vld [vmem:[#allocation8 + $0x1e0] sm:$0xff]
    %v1794 = vld [vmem:[#allocation8 + $0x1e8] sm:$0xff]
    %v1795 = vld [vmem:[#allocation8 + $0x1f0] sm:$0xff]
    %v1796 = vld [vmem:[#allocation8 + $0x1f8] sm:$0xff]
    %v1797 = vld [vmem:[#allocation8 + $0x200] sm:$0xff]
    %v1798 = vld [vmem:[#allocation8 + $0x208] sm:$0xff]
    %v1799 = vld [vmem:[#allocation8 + $0x210] sm:$0xff]
    %v1800 = vld [vmem:[#allocation8 + $0x218] sm:$0xff]
    %v1801 = vld [vmem:[#allocation8 + $0x220] sm:$0xff]
    %v1802 = vld [vmem:[#allocation8 + $0x228] sm:$0xff]
    %v1803 = vld [vmem:[#allocation8 + $0x230] sm:$0xff]
    %v1804 = vld [vmem:[#allocation8 + $0x238] sm:$0xff]
    %v1805 = vld [vmem:[#allocation8 + $0x240] sm:$0xff]
    %v1806 = vld [vmem:[#allocation8 + $0x248] sm:$0xff]
    %v1807 = vld [vmem:[#allocation8 + $0x250] sm:$0xff]
    %v1808 = vld [vmem:[#allocation8 + $0x258] sm:$0xff]
    %v1809 = vld [vmem:[#allocation8 + $0x260] sm:$0xff]
    %v1810 = vld [vmem:[#allocation8 + $0x268] sm:$0xff]
    %v1811 = vld [vmem:[#allocation8 + $0x270] sm:$0xff]
    %v1812 = vld [vmem:[#allocation8 + $0x278] sm:$0xff]
    %v1813 = vld [vmem:[#allocation8 + $0x280] sm:$0xff]
    %v1814 = vld [vmem:[#allocation8 + $0x288] sm:$0xff]
    %v1815 = vld [vmem:[#allocation8 + $0x290] sm:$0xff]
    %v1816 = vld [vmem:[#allocation8 + $0x298] sm:$0xff]
    %v1817 = vld [vmem:[#allocation8 + $0x2a0] sm:$0xff]
    %v1818 = vld [vmem:[#allocation8 + $0x2a8] sm:$0xff]
    %v1819 = vld [vmem:[#allocation8 + $0x2b0] sm:$0xff]
    %v1820 = vld [vmem:[#allocation8 + $0x2b8] sm:$0xff]
    %v1821 = vld [vmem:[#allocation8 + $0x2c0] sm:$0xff]
    %v1822 = vld [vmem:[#allocation8 + $0x2c8] sm:$0xff]
    %v1823 = vld [vmem:[#allocation8 + $0x2d0] sm:$0xff]
    %v1824 = vld [vmem:[#allocation8 + $0x2d8] sm:$0xff]
    %v1825 = vld [vmem:[#allocation8 + $0x2e0] sm:$0xff]
    %v1826 = vld [vmem:[#allocation8 + $0x2e8] sm:$0xff]
    %v1827 = vld [vmem:[#allocation8 + $0x2f0] sm:$0xff]
    %v1828 = vld [vmem:[#allocation8 + $0x2f8] sm:$0xff]
    %v1829 = vld [vmem:[#allocation8 + $0x300] sm:$0xff]
    %v1830 = vld [vmem:[#allocation8 + $0x308] sm:$0xff]
    %v1831 = vld [vmem:[#allocation8 + $0x310] sm:$0xff]
    %v1832 = vld [vmem:[#allocation8 + $0x318] sm:$0xff]
    %v1833 = vld [vmem:[#allocation8 + $0x320] sm:$0xff]
    %v1834 = vld [vmem:[#allocation8 + $0x328] sm:$0xff]
    %v1835 = vld [vmem:[#allocation8 + $0x330] sm:$0xff]
    %v1836 = vld [vmem:[#allocation8 + $0x338] sm:$0xff]
    %v1837 = vld [vmem:[#allocation8 + $0x340] sm:$0xff]
    %v1838 = vld [vmem:[#allocation8 + $0x348] sm:$0xff]
    %v1839 = vld [vmem:[#allocation8 + $0x350] sm:$0xff]
    %v1840 = vld [vmem:[#allocation8 + $0x358] sm:$0xff]
    %v1841 = vld [vmem:[#allocation8 + $0x360] sm:$0xff]
    %v1842 = vld [vmem:[#allocation8 + $0x368] sm:$0xff]
    %v1843 = vld [vmem:[#allocation8 + $0x370] sm:$0xff]
    %v1844 = vld [vmem:[#allocation8 + $0x378] sm:$0xff]
    %v1845 = vld [vmem:[#allocation8 + $0x380] sm:$0xff]
    %v1846 = vld [vmem:[#allocation8 + $0x388] sm:$0xff]
    %v1847 = vld [vmem:[#allocation8 + $0x390] sm:$0xff]
    %v1848 = vld [vmem:[#allocation8 + $0x398] sm:$0xff]
    %v1849 = vld [vmem:[#allocation8 + $0x3a0] sm:$0xff]
    %v1850 = vld [vmem:[#allocation8 + $0x3a8] sm:$0xff]
    %v1851 = vld [vmem:[#allocation8 + $0x3b0] sm:$0xff]
    %v1852 = vld [vmem:[#allocation8 + $0x3b8] sm:$0xff]
    %v1853 = vld [vmem:[#allocation8 + $0x3c0] sm:$0xff]
    %v1854 = vld [vmem:[#allocation8 + $0x3c8] sm:$0xff]
    %v1855 = vld [vmem:[#allocation8 + $0x3d0] sm:$0xff]
    %v1856 = vld [vmem:[#allocation8 + $0x3d8] sm:$0xff]
    %v1857 = vld [vmem:[#allocation8 + $0x3e0] sm:$0xff]
    %v1858 = vld [vmem:[#allocation8 + $0x3e8] sm:$0xff]
    %v1859 = vld [vmem:[#allocation8 + $0x3f0] sm:$0xff]
    %v1860 = vld [vmem:[#allocation8 + $0x3f8] sm:$0xff]
    %v1861 = vld [vmem:[#allocation10] sm:$0xf]
    %v1863 = vperm.slane %v1861, 0
    %v1864 = vperm.slane %v1861, 1
    %v1865 = vperm.slane %v1861, 2
    %v1866 = vperm.slane %v1861, 3
    %v1999 = vunpack.c.l.b16 %v1733
    %v2000 = vunpack.c.h.b16 %v1733
    %v2001 = vunpack.c.l.b16 %v1734
    %v2002 = vunpack.c.h.b16 %v1734
    %v2003 = vunpack.c.l.b16 %v1735
    %v2004 = vunpack.c.h.b16 %v1735
    %v2005 = vunpack.c.l.b16 %v1736
    %v2006 = vunpack.c.h.b16 %v1736
    %v2007 = vunpack.c.l.b16 %v1737
    %v2008 = vunpack.c.h.b16 %v1737
    %v2009 = vunpack.c.l.b16 %v1738
    %v2010 = vunpack.c.h.b16 %v1738
    %v2011 = vunpack.c.l.b16 %v1739
    %v2012 = vunpack.c.h.b16 %v1739
    %v2013 = vunpack.c.l.b16 %v1740
    %v2014 = vunpack.c.h.b16 %v1740
    %v2015 = vunpack.c.l.b16 %v1741
    %v2016 = vunpack.c.h.b16 %v1741
    %v2017 = vunpack.c.l.b16 %v1742
    %v2018 = vunpack.c.h.b16 %v1742
    %v2019 = vunpack.c.l.b16 %v1743
    %v2020 = vunpack.c.h.b16 %v1743
    %v2021 = vunpack.c.l.b16 %v1744
    %v2022 = vunpack.c.h.b16 %v1744
    %v2023 = vunpack.c.l.b16 %v1745
    %v2024 = vunpack.c.h.b16 %v1745
    %v2025 = vunpack.c.l.b16 %v1746
    %v2026 = vunpack.c.h.b16 %v1746
    %v2027 = vunpack.c.l.b16 %v1747
    %v2028 = vunpack.c.h.b16 %v1747
    %v2029 = vunpack.c.l.b16 %v1748
    %v2030 = vunpack.c.h.b16 %v1748
    %v2031 = vunpack.c.l.b16 %v1749
    %v2032 = vunpack.c.h.b16 %v1749
    %v2033 = vunpack.c.l.b16 %v1750
    %v2034 = vunpack.c.h.b16 %v1750
    %v2035 = vunpack.c.l.b16 %v1751
    %v2036 = vunpack.c.h.b16 %v1751
    %v2037 = vunpack.c.l.b16 %v1752
    %v2038 = vunpack.c.h.b16 %v1752
    %v2039 = vunpack.c.l.b16 %v1753
    %v2040 = vunpack.c.h.b16 %v1753
    %v2041 = vunpack.c.l.b16 %v1754
    %v2042 = vunpack.c.h.b16 %v1754
    %v2043 = vunpack.c.l.b16 %v1755
    %v2044 = vunpack.c.h.b16 %v1755
    %v2045 = vunpack.c.l.b16 %v1756
    %v2046 = vunpack.c.h.b16 %v1756
    %v2047 = vunpack.c.l.b16 %v1757
    %v2048 = vunpack.c.h.b16 %v1757
    %v2049 = vunpack.c.l.b16 %v1758
    %v2050 = vunpack.c.h.b16 %v1758
    %v2051 = vunpack.c.l.b16 %v1759
    %v2052 = vunpack.c.h.b16 %v1759
    %v2053 = vunpack.c.l.b16 %v1760
    %v2054 = vunpack.c.h.b16 %v1760
    %v2055 = vunpack.c.l.b16 %v1761
    %v2056 = vunpack.c.h.b16 %v1761
    %v2057 = vunpack.c.l.b16 %v1762
    %v2058 = vunpack.c.h.b16 %v1762
    %v2059 = vunpack.c.l.b16 %v1763
    %v2060 = vunpack.c.h.b16 %v1763
    %v2061 = vunpack.c.l.b16 %v1764
    %v2062 = vunpack.c.h.b16 %v1764
    %v2063 = vunpack.c.l.b16 %v1765
    %v2064 = vunpack.c.h.b16 %v1765
    %v2065 = vunpack.c.l.b16 %v1766
    %v2066 = vunpack.c.h.b16 %v1766
    %v2067 = vunpack.c.l.b16 %v1767
    %v2068 = vunpack.c.h.b16 %v1767
    %v2069 = vunpack.c.l.b16 %v1768
    %v2070 = vunpack.c.h.b16 %v1768
    %v2071 = vunpack.c.l.b16 %v1769
    %v2072 = vunpack.c.h.b16 %v1769
    %v2073 = vunpack.c.l.b16 %v1770
    %v2074 = vunpack.c.h.b16 %v1770
    %v2075 = vunpack.c.l.b16 %v1771
    %v2076 = vunpack.c.h.b16 %v1771
    %v2077 = vunpack.c.l.b16 %v1772
    %v2078 = vunpack.c.h.b16 %v1772
    %v2079 = vunpack.c.l.b16 %v1773
    %v2080 = vunpack.c.h.b16 %v1773
    %v2081 = vunpack.c.l.b16 %v1774
    %v2082 = vunpack.c.h.b16 %v1774
    %v2083 = vunpack.c.l.b16 %v1775
    %v2084 = vunpack.c.h.b16 %v1775
    %v2085 = vunpack.c.l.b16 %v1776
    %v2086 = vunpack.c.h.b16 %v1776
    %v2087 = vunpack.c.l.b16 %v1777
    %v2088 = vunpack.c.h.b16 %v1777
    %v2089 = vunpack.c.l.b16 %v1778
    %v2090 = vunpack.c.h.b16 %v1778
    %v2091 = vunpack.c.l.b16 %v1779
    %v2092 = vunpack.c.h.b16 %v1779
    %v2093 = vunpack.c.l.b16 %v1780
    %v2094 = vunpack.c.h.b16 %v1780
    %v2095 = vunpack.c.l.b16 %v1781
    %v2096 = vunpack.c.h.b16 %v1781
    %v2097 = vunpack.c.l.b16 %v1782
    %v2098 = vunpack.c.h.b16 %v1782
    %v2099 = vunpack.c.l.b16 %v1783
    %v2100 = vunpack.c.h.b16 %v1783
    %v2101 = vunpack.c.l.b16 %v1784
    %v2102 = vunpack.c.h.b16 %v1784
    %v2103 = vunpack.c.l.b16 %v1785
    %v2104 = vunpack.c.h.b16 %v1785
    %v2105 = vunpack.c.l.b16 %v1786
    %v2106 = vunpack.c.h.b16 %v1786
    %v2107 = vunpack.c.l.b16 %v1787
    %v2108 = vunpack.c.h.b16 %v1787
    %v2109 = vunpack.c.l.b16 %v1788
    %v2110 = vunpack.c.h.b16 %v1788
    %v2111 = vunpack.c.l.b16 %v1789
    %v2112 = vunpack.c.h.b16 %v1789
    %v2113 = vunpack.c.l.b16 %v1790
    %v2114 = vunpack.c.h.b16 %v1790
    %v2115 = vunpack.c.l.b16 %v1791
    %v2116 = vunpack.c.h.b16 %v1791
    %v2117 = vunpack.c.l.b16 %v1792
    %v2118 = vunpack.c.h.b16 %v1792
    %v2119 = vunpack.c.l.b16 %v1793
    %v2120 = vunpack.c.h.b16 %v1793
    %v2121 = vunpack.c.l.b16 %v1794
    %v2122 = vunpack.c.h.b16 %v1794
    %v2123 = vunpack.c.l.b16 %v1795
    %v2124 = vunpack.c.h.b16 %v1795
    %v2125 = vunpack.c.l.b16 %v1796
    %v2126 = vunpack.c.h.b16 %v1796
    %v2127 = vunpack.c.l.b16 %v1797
    %v2128 = vunpack.c.h.b16 %v1797
    %v2129 = vunpack.c.l.b16 %v1798
    %v2130 = vunpack.c.h.b16 %v1798
    %v2131 = vunpack.c.l.b16 %v1799
    %v2132 = vunpack.c.h.b16 %v1799
    %v2133 = vunpack.c.l.b16 %v1800
    %v2134 = vunpack.c.h.b16 %v1800
    %v2135 = vunpack.c.l.b16 %v1801
    %v2136 = vunpack.c.h.b16 %v1801
    %v2137 = vunpack.c.l.b16 %v1802
    %v2138 = vunpack.c.h.b16 %v1802
    %v2139 = vunpack.c.l.b16 %v1803
    %v2140 = vunpack.c.h.b16 %v1803
    %v2141 = vunpack.c.l.b16 %v1804
    %v2142 = vunpack.c.h.b16 %v1804
    %v2143 = vunpack.c.l.b16 %v1805
    %v2144 = vunpack.c.h.b16 %v1805
    %v2145 = vunpack.c.l.b16 %v1806
    %v2146 = vunpack.c.h.b16 %v1806
    %v2147 = vunpack.c.l.b16 %v1807
    %v2148 = vunpack.c.h.b16 %v1807
    %v2149 = vunpack.c.l.b16 %v1808
    %v2150 = vunpack.c.h.b16 %v1808
    %v2151 = vunpack.c.l.b16 %v1809
    %v2152 = vunpack.c.h.b16 %v1809
    %v2153 = vunpack.c.l.b16 %v1810
    %v2154 = vunpack.c.h.b16 %v1810
    %v2155 = vunpack.c.l.b16 %v1811
    %v2156 = vunpack.c.h.b16 %v1811
    %v2157 = vunpack.c.l.b16 %v1812
    %v2158 = vunpack.c.h.b16 %v1812
    %v2159 = vunpack.c.l.b16 %v1813
    %v2160 = vunpack.c.h.b16 %v1813
    %v2161 = vunpack.c.l.b16 %v1814
    %v2162 = vunpack.c.h.b16 %v1814
    %v2163 = vunpack.c.l.b16 %v1815
    %v2164 = vunpack.c.h.b16 %v1815
    %v2165 = vunpack.c.l.b16 %v1816
    %v2166 = vunpack.c.h.b16 %v1816
    %v2167 = vunpack.c.l.b16 %v1817
    %v2168 = vunpack.c.h.b16 %v1817
    %v2169 = vunpack.c.l.b16 %v1818
    %v2170 = vunpack.c.h.b16 %v1818
    %v2171 = vunpack.c.l.b16 %v1819
    %v2172 = vunpack.c.h.b16 %v1819
    %v2173 = vunpack.c.l.b16 %v1820
    %v2174 = vunpack.c.h.b16 %v1820
    %v2175 = vunpack.c.l.b16 %v1821
    %v2176 = vunpack.c.h.b16 %v1821
    %v2177 = vunpack.c.l.b16 %v1822
    %v2178 = vunpack.c.h.b16 %v1822
    %v2179 = vunpack.c.l.b16 %v1823
    %v2180 = vunpack.c.h.b16 %v1823
    %v2181 = vunpack.c.l.b16 %v1824
    %v2182 = vunpack.c.h.b16 %v1824
    %v2183 = vunpack.c.l.b16 %v1825
    %v2184 = vunpack.c.h.b16 %v1825
    %v2185 = vunpack.c.l.b16 %v1826
    %v2186 = vunpack.c.h.b16 %v1826
    %v2187 = vunpack.c.l.b16 %v1827
    %v2188 = vunpack.c.h.b16 %v1827
    %v2189 = vunpack.c.l.b16 %v1828
    %v2190 = vunpack.c.h.b16 %v1828
    %v2191 = vunpack.c.l.b16 %v1829
    %v2192 = vunpack.c.h.b16 %v1829
    %v2193 = vunpack.c.l.b16 %v1830
    %v2194 = vunpack.c.h.b16 %v1830
    %v2195 = vunpack.c.l.b16 %v1831
    %v2196 = vunpack.c.h.b16 %v1831
    %v2197 = vunpack.c.l.b16 %v1832
    %v2198 = vunpack.c.h.b16 %v1832
    %v2199 = vunpack.c.l.b16 %v1833
    %v2200 = vunpack.c.h.b16 %v1833
    %v2201 = vunpack.c.l.b16 %v1834
    %v2202 = vunpack.c.h.b16 %v1834
    %v2203 = vunpack.c.l.b16 %v1835
    %v2204 = vunpack.c.h.b16 %v1835
    %v2205 = vunpack.c.l.b16 %v1836
    %v2206 = vunpack.c.h.b16 %v1836
    %v2207 = vunpack.c.l.b16 %v1837
    %v2208 = vunpack.c.h.b16 %v1837
    %v2209 = vunpack.c.l.b16 %v1838
    %v2210 = vunpack.c.h.b16 %v1838
    %v2211 = vunpack.c.l.b16 %v1839
    %v2212 = vunpack.c.h.b16 %v1839
    %v2213 = vunpack.c.l.b16 %v1840
    %v2214 = vunpack.c.h.b16 %v1840
    %v2215 = vunpack.c.l.b16 %v1841
    %v2216 = vunpack.c.h.b16 %v1841
    %v2217 = vunpack.c.l.b16 %v1842
    %v2218 = vunpack.c.h.b16 %v1842
    %v2219 = vunpack.c.l.b16 %v1843
    %v2220 = vunpack.c.h.b16 %v1843
    %v2221 = vunpack.c.l.b16 %v1844
    %v2222 = vunpack.c.h.b16 %v1844
    %v2223 = vunpack.c.l.b16 %v1845
    %v2224 = vunpack.c.h.b16 %v1845
    %v2225 = vunpack.c.l.b16 %v1846
    %v2226 = vunpack.c.h.b16 %v1846
    %v2227 = vunpack.c.l.b16 %v1847
    %v2228 = vunpack.c.h.b16 %v1847
    %v2229 = vunpack.c.l.b16 %v1848
    %v2230 = vunpack.c.h.b16 %v1848
    %v2231 = vunpack.c.l.b16 %v1849
    %v2232 = vunpack.c.h.b16 %v1849
    %v2233 = vunpack.c.l.b16 %v1850
    %v2234 = vunpack.c.h.b16 %v1850
    %v2235 = vunpack.c.l.b16 %v1851
    %v2236 = vunpack.c.h.b16 %v1851
    %v2237 = vunpack.c.l.b16 %v1852
    %v2238 = vunpack.c.h.b16 %v1852
    %v2239 = vunpack.c.l.b16 %v1853
    %v2240 = vunpack.c.h.b16 %v1853
    %v2241 = vunpack.c.l.b16 %v1854
    %v2242 = vunpack.c.h.b16 %v1854
    %v2243 = vunpack.c.l.b16 %v1855
    %v2244 = vunpack.c.h.b16 %v1855
    %v2245 = vunpack.c.l.b16 %v1856
    %v2246 = vunpack.c.h.b16 %v1856
    %v2247 = vunpack.c.l.b16 %v1857
    %v2248 = vunpack.c.h.b16 %v1857
    %v2249 = vunpack.c.l.b16 %v1858
    %v2250 = vunpack.c.h.b16 %v1858
    %v2251 = vunpack.c.l.b16 %v1859
    %v2252 = vunpack.c.h.b16 %v1859
    %v2253 = vunpack.c.l.b16 %v1860
    %v2254 = vunpack.c.h.b16 %v1860
    %v2255 = vpack.c.b16 %v2003, %v1999
    %v2256 = vpack.c.b16 %v2004, %v2000
    %v2257 = vpack.c.b16 %v2005, %v2001
    %v2258 = vpack.c.b16 %v2006, %v2002
    %v2259 = vpack.c.b16 %v2011, %v2007
    %v2260 = vpack.c.b16 %v2012, %v2008
    %v2261 = vpack.c.b16 %v2013, %v2009
    %v2262 = vpack.c.b16 %v2014, %v2010
    %v2263 = vpack.c.b16 %v2019, %v2015
    %v2264 = vpack.c.b16 %v2020, %v2016
    %v2265 = vpack.c.b16 %v2021, %v2017
    %v2266 = vpack.c.b16 %v2022, %v2018
    %v2267 = vpack.c.b16 %v2027, %v2023
    %v2268 = vpack.c.b16 %v2028, %v2024
    %v2269 = vpack.c.b16 %v2029, %v2025
    %v2270 = vpack.c.b16 %v2030, %v2026
    %v2271 = vpack.c.b16 %v2035, %v2031
    %v2272 = vpack.c.b16 %v2036, %v2032
    %v2273 = vpack.c.b16 %v2037, %v2033
    %v2274 = vpack.c.b16 %v2038, %v2034
    %v2275 = vpack.c.b16 %v2043, %v2039
    %v2276 = vpack.c.b16 %v2044, %v2040
    %v2277 = vpack.c.b16 %v2045, %v2041
    %v2278 = vpack.c.b16 %v2046, %v2042
    %v2279 = vpack.c.b16 %v2051, %v2047
    %v2280 = vpack.c.b16 %v2052, %v2048
    %v2281 = vpack.c.b16 %v2053, %v2049
    %v2282 = vpack.c.b16 %v2054, %v2050
    %v2283 = vpack.c.b16 %v2059, %v2055
    %v2284 = vpack.c.b16 %v2060, %v2056
    %v2285 = vpack.c.b16 %v2061, %v2057
    %v2286 = vpack.c.b16 %v2062, %v2058
    %v2287 = vpack.c.b16 %v2067, %v2063
    %v2288 = vpack.c.b16 %v2068, %v2064
    %v2289 = vpack.c.b16 %v2069, %v2065
    %v2290 = vpack.c.b16 %v2070, %v2066
    %v2291 = vpack.c.b16 %v2075, %v2071
    %v2292 = vpack.c.b16 %v2076, %v2072
    %v2293 = vpack.c.b16 %v2077, %v2073
    %v2294 = vpack.c.b16 %v2078, %v2074
    %v2295 = vpack.c.b16 %v2083, %v2079
    %v2296 = vpack.c.b16 %v2084, %v2080
    %v2297 = vpack.c.b16 %v2085, %v2081
    %v2298 = vpack.c.b16 %v2086, %v2082
    %v2299 = vpack.c.b16 %v2091, %v2087
    %v2300 = vpack.c.b16 %v2092, %v2088
    %v2301 = vpack.c.b16 %v2093, %v2089
    %v2302 = vpack.c.b16 %v2094, %v2090
    %v2303 = vpack.c.b16 %v2099, %v2095
    %v2304 = vpack.c.b16 %v2100, %v2096
    %v2305 = vpack.c.b16 %v2101, %v2097
    %v2306 = vpack.c.b16 %v2102, %v2098
    %v2307 = vpack.c.b16 %v2107, %v2103
    %v2308 = vpack.c.b16 %v2108, %v2104
    %v2309 = vpack.c.b16 %v2109, %v2105
    %v2310 = vpack.c.b16 %v2110, %v2106
    %v2311 = vpack.c.b16 %v2115, %v2111
    %v2312 = vpack.c.b16 %v2116, %v2112
    %v2313 = vpack.c.b16 %v2117, %v2113
    %v2314 = vpack.c.b16 %v2118, %v2114
    %v2315 = vpack.c.b16 %v2123, %v2119
    %v2316 = vpack.c.b16 %v2124, %v2120
    %v2317 = vpack.c.b16 %v2125, %v2121
    %v2318 = vpack.c.b16 %v2126, %v2122
    %v2319 = vpack.c.b16 %v2131, %v2127
    %v2320 = vpack.c.b16 %v2132, %v2128
    %v2321 = vpack.c.b16 %v2133, %v2129
    %v2322 = vpack.c.b16 %v2134, %v2130
    %v2323 = vpack.c.b16 %v2139, %v2135
    %v2324 = vpack.c.b16 %v2140, %v2136
    %v2325 = vpack.c.b16 %v2141, %v2137
    %v2326 = vpack.c.b16 %v2142, %v2138
    %v2327 = vpack.c.b16 %v2147, %v2143
    %v2328 = vpack.c.b16 %v2148, %v2144
    %v2329 = vpack.c.b16 %v2149, %v2145
    %v2330 = vpack.c.b16 %v2150, %v2146
    %v2331 = vpack.c.b16 %v2155, %v2151
    %v2332 = vpack.c.b16 %v2156, %v2152
    %v2333 = vpack.c.b16 %v2157, %v2153
    %v2334 = vpack.c.b16 %v2158, %v2154
    %v2335 = vpack.c.b16 %v2163, %v2159
    %v2336 = vpack.c.b16 %v2164, %v2160
    %v2337 = vpack.c.b16 %v2165, %v2161
    %v2338 = vpack.c.b16 %v2166, %v2162
    %v2339 = vpack.c.b16 %v2171, %v2167
    %v2340 = vpack.c.b16 %v2172, %v2168
    %v2341 = vpack.c.b16 %v2173, %v2169
    %v2342 = vpack.c.b16 %v2174, %v2170
    %v2343 = vpack.c.b16 %v2179, %v2175
    %v2344 = vpack.c.b16 %v2180, %v2176
    %v2345 = vpack.c.b16 %v2181, %v2177
    %v2346 = vpack.c.b16 %v2182, %v2178
    %v2347 = vpack.c.b16 %v2187, %v2183
    %v2348 = vpack.c.b16 %v2188, %v2184
    %v2349 = vpack.c.b16 %v2189, %v2185
    %v2350 = vpack.c.b16 %v2190, %v2186
    %v2351 = vpack.c.b16 %v2195, %v2191
    %v2352 = vpack.c.b16 %v2196, %v2192
    %v2353 = vpack.c.b16 %v2197, %v2193
    %v2354 = vpack.c.b16 %v2198, %v2194
    %v2355 = vpack.c.b16 %v2203, %v2199
    %v2356 = vpack.c.b16 %v2204, %v2200
    %v2357 = vpack.c.b16 %v2205, %v2201
    %v2358 = vpack.c.b16 %v2206, %v2202
    %v2359 = vpack.c.b16 %v2211, %v2207
    %v2360 = vpack.c.b16 %v2212, %v2208
    %v2361 = vpack.c.b16 %v2213, %v2209
    %v2362 = vpack.c.b16 %v2214, %v2210
    %v2363 = vpack.c.b16 %v2219, %v2215
    %v2364 = vpack.c.b16 %v2220, %v2216
    %v2365 = vpack.c.b16 %v2221, %v2217
    %v2366 = vpack.c.b16 %v2222, %v2218
    %v2367 = vpack.c.b16 %v2227, %v2223
    %v2368 = vpack.c.b16 %v2228, %v2224
    %v2369 = vpack.c.b16 %v2229, %v2225
    %v2370 = vpack.c.b16 %v2230, %v2226
    %v2371 = vpack.c.b16 %v2235, %v2231
    %v2372 = vpack.c.b16 %v2236, %v2232
    %v2373 = vpack.c.b16 %v2237, %v2233
    %v2374 = vpack.c.b16 %v2238, %v2234
    %v2375 = vpack.c.b16 %v2243, %v2239
    %v2376 = vpack.c.b16 %v2244, %v2240
    %v2377 = vpack.c.b16 %v2245, %v2241
    %v2378 = vpack.c.b16 %v2246, %v2242
    %v2379 = vpack.c.b16 %v2251, %v2247
    %v2380 = vpack.c.b16 %v2252, %v2248
    %v2381 = vpack.c.b16 %v2253, %v2249
    %v2382 = vpack.c.b16 %v2254, %v2250
    %2511 = vmatpush.bf16.msra.mxu0 %v2283
    %2512 = vmatpush.bf16.msra.mxu0 %v2279
    %2513 = vmatpush.bf16.msra.mxu0 %v2275
    %2514 = vmatpush.bf16.msra.mxu0 %v2271
    %2515 = vmatpush.bf16.msra.mxu0 %v2267
    %2516 = vmatpush.bf16.msra.mxu0 %v2263
    %2517 = vmatpush.bf16.msra.mxu0 %v2259
    %2518 = vmatpush.bf16.msra.mxu0 %v2255
    %2519 = vmatmul.bf16.gmra.mxu0 %v1729
    %v2520 = vpop.f32.mrf.mxu0
    %v2521 = vadd.f32 %v1863, %v2520
    %v2522 = vpop.f32.mrf.mxu0
    %v2523 = vadd.f32 %v1863, %v2522
    %2524 = vdwg.mxu0
    %2525 = vmatpush.bf16.msra.mxu0 %v2315
    %2526 = vmatpush.bf16.msra.mxu0 %v2311
    %2527 = vmatpush.bf16.msra.mxu0 %v2307
    %2528 = vmatpush.bf16.msra.mxu0 %v2303
    %2529 = vmatpush.bf16.msra.mxu0 %v2299
    %2530 = vmatpush.bf16.msra.mxu0 %v2295
    %2531 = vmatpush.bf16.msra.mxu0 %v2291
    %2532 = vmatpush.bf16.msra.mxu0 %v2287
    %2533 = vmatmul.bf16.gmra.mxu0 %v1730
    %v2534 = vpop.f32.mrf.mxu0
    %v2535 = vadd.f32 %v2521, %v2534
    %v2536 = vpop.f32.mrf.mxu0
    %v2537 = vadd.f32 %v2523, %v2536
    %2538 = vdwg.mxu0
    %2539 = vmatpush.bf16.msra.mxu0 %v2347
    %2540 = vmatpush.bf16.msra.mxu0 %v2343
    %2541 = vmatpush.bf16.msra.mxu0 %v2339
    %2542 = vmatpush.bf16.msra.mxu0 %v2335
    %2543 = vmatpush.bf16.msra.mxu0 %v2331
    %2544 = vmatpush.bf16.msra.mxu0 %v2327
    %2545 = vmatpush.bf16.msra.mxu0 %v2323
    %2546 = vmatpush.bf16.msra.mxu0 %v2319
    %2547 = vmatmul.bf16.gmra.mxu0 %v1731
    %v2548 = vpop.f32.mrf.mxu0
    %v2549 = vadd.f32 %v2535, %v2548
    %v2550 = vpop.f32.mrf.mxu0
    %v2551 = vadd.f32 %v2537, %v2550
    %2552 = vdwg.mxu0
    %2553 = vmatpush.bf16.msra.mxu0 %v2379
    %2554 = vmatpush.bf16.msra.mxu0 %v2375
    %2555 = vmatpush.bf16.msra.mxu0 %v2371
    %2556 = vmatpush.bf16.msra.mxu0 %v2367
    %2557 = vmatpush.bf16.msra.mxu0 %v2363
    %2558 = vmatpush.bf16.msra.mxu0 %v2359
    %2559 = vmatpush.bf16.msra.mxu0 %v2355
    %2560 = vmatpush.bf16.msra.mxu0 %v2351
    %2561 = vmatmul.bf16.gmra.mxu0 %v1732
    %v2562 = vpop.f32.mrf.mxu0
    %v2563 = vadd.f32 %v2549, %v2562
    %v2564 = vpop.f32.mrf.mxu0
    %v2565 = vadd.f32 %v2551, %v2564
    %2566 = vdwg.mxu0
    %2567 = vmatpush.bf16.msra.mxu0 %v2284
    %2568 = vmatpush.bf16.msra.mxu0 %v2280
    %2569 = vmatpush.bf16.msra.mxu0 %v2276
    %2570 = vmatpush.bf16.msra.mxu0 %v2272
    %2571 = vmatpush.bf16.msra.mxu0 %v2268
    %2572 = vmatpush.bf16.msra.mxu0 %v2264
    %2573 = vmatpush.bf16.msra.mxu0 %v2260
    %2574 = vmatpush.bf16.msra.mxu0 %v2256
    %2575 = vmatmul.bf16.gmra.mxu0 %v1729
    %v2576 = vpop.f32.mrf.mxu0
    %v2577 = vadd.f32 %v1864, %v2576
    %v2578 = vpop.f32.mrf.mxu0
    %v2579 = vadd.f32 %v1864, %v2578
    %2580 = vdwg.mxu0
    %2581 = vmatpush.bf16.msra.mxu0 %v2316
    %2582 = vmatpush.bf16.msra.mxu0 %v2312
    %2583 = vmatpush.bf16.msra.mxu0 %v2308
    %2584 = vmatpush.bf16.msra.mxu0 %v2304
    %2585 = vmatpush.bf16.msra.mxu0 %v2300
    %2586 = vmatpush.bf16.msra.mxu0 %v2296
    %2587 = vmatpush.bf16.msra.mxu0 %v2292
    %2588 = vmatpush.bf16.msra.mxu0 %v2288
    %2589 = vmatmul.bf16.gmra.mxu0 %v1730
    %v2590 = vpop.f32.mrf.mxu0
    %v2591 = vadd.f32 %v2577, %v2590
    %v2592 = vpop.f32.mrf.mxu0
    %v2593 = vadd.f32 %v2579, %v2592
    %2594 = vdwg.mxu0
    %2595 = vmatpush.bf16.msra.mxu0 %v2348
    %2596 = vmatpush.bf16.msra.mxu0 %v2344
    %2597 = vmatpush.bf16.msra.mxu0 %v2340
    %2598 = vmatpush.bf16.msra.mxu0 %v2336
    %2599 = vmatpush.bf16.msra.mxu0 %v2332
    %2600 = vmatpush.bf16.msra.mxu0 %v2328
    %2601 = vmatpush.bf16.msra.mxu0 %v2324
    %2602 = vmatpush.bf16.msra.mxu0 %v2320
    %2603 = vmatmul.bf16.gmra.mxu0 %v1731
    %v2604 = vpop.f32.mrf.mxu0
    %v2605 = vadd.f32 %v2591, %v2604
    %v2606 = vpop.f32.mrf.mxu0
    %v2607 = vadd.f32 %v2593, %v2606
    %2608 = vdwg.mxu0
    %2609 = vmatpush.bf16.msra.mxu0 %v2380
    %2610 = vmatpush.bf16.msra.mxu0 %v2376
    %2611 = vmatpush.bf16.msra.mxu0 %v2372
    %2612 = vmatpush.bf16.msra.mxu0 %v2368
    %2613 = vmatpush.bf16.msra.mxu0 %v2364
    %2614 = vmatpush.bf16.msra.mxu0 %v2360
    %2615 = vmatpush.bf16.msra.mxu0 %v2356
    %2616 = vmatpush.bf16.msra.mxu0 %v2352
    %2617 = vmatmul.bf16.gmra.mxu0 %v1732
    %v2618 = vpop.f32.mrf.mxu0
    %v2619 = vadd.f32 %v2605, %v2618
    %v2620 = vpop.f32.mrf.mxu0
    %v2621 = vadd.f32 %v2607, %v2620
    %2622 = vdwg.mxu0
    %2623 = vmatpush.bf16.msra.mxu0 %v2285
    %2624 = vmatpush.bf16.msra.mxu0 %v2281
    %2625 = vmatpush.bf16.msra.mxu0 %v2277
    %2626 = vmatpush.bf16.msra.mxu0 %v2273
    %2627 = vmatpush.bf16.msra.mxu0 %v2269
    %2628 = vmatpush.bf16.msra.mxu0 %v2265
    %2629 = vmatpush.bf16.msra.mxu0 %v2261
    %2630 = vmatpush.bf16.msra.mxu0 %v2257
    %2631 = vmatmul.bf16.gmra.mxu0 %v1729
    %v2632 = vpop.f32.mrf.mxu0
    %v2633 = vadd.f32 %v1865, %v2632
    %v2634 = vpop.f32.mrf.mxu0
    %v2635 = vadd.f32 %v1865, %v2634
    %2636 = vdwg.mxu0
    %2637 = vmatpush.bf16.msra.mxu0 %v2317
    %2638 = vmatpush.bf16.msra.mxu0 %v2313
    %2639 = vmatpush.bf16.msra.mxu0 %v2309
    %2640 = vmatpush.bf16.msra.mxu0 %v2305
    %2641 = vmatpush.bf16.msra.mxu0 %v2301
    %2642 = vmatpush.bf16.msra.mxu0 %v2297
    %2643 = vmatpush.bf16.msra.mxu0 %v2293
    %2644 = vmatpush.bf16.msra.mxu0 %v2289
    %2645 = vmatmul.bf16.gmra.mxu0 %v1730
    %v2646 = vpop.f32.mrf.mxu0
    %v2647 = vadd.f32 %v2633, %v2646
    %v2648 = vpop.f32.mrf.mxu0
    %v2649 = vadd.f32 %v2635, %v2648
    %2650 = vdwg.mxu0
    %2651 = vmatpush.bf16.msra.mxu0 %v2349
    %2652 = vmatpush.bf16.msra.mxu0 %v2345
    %2653 = vmatpush.bf16.msra.mxu0 %v2341
    %2654 = vmatpush.bf16.msra.mxu0 %v2337
    %2655 = vmatpush.bf16.msra.mxu0 %v2333
    %2656 = vmatpush.bf16.msra.mxu0 %v2329
    %2657 = vmatpush.bf16.msra.mxu0 %v2325
    %2658 = vmatpush.bf16.msra.mxu0 %v2321
    %2659 = vmatmul.bf16.gmra.mxu0 %v1731
    %v2660 = vpop.f32.mrf.mxu0
    %v2661 = vadd.f32 %v2647, %v2660
    %v2662 = vpop.f32.mrf.mxu0
    %v2663 = vadd.f32 %v2649, %v2662
    %2664 = vdwg.mxu0
    %2665 = vmatpush.bf16.msra.mxu0 %v2381
    %2666 = vmatpush.bf16.msra.mxu0 %v2377
    %2667 = vmatpush.bf16.msra.mxu0 %v2373
    %2668 = vmatpush.bf16.msra.mxu0 %v2369
    %2669 = vmatpush.bf16.msra.mxu0 %v2365
    %2670 = vmatpush.bf16.msra.mxu0 %v2361
    %2671 = vmatpush.bf16.msra.mxu0 %v2357
    %2672 = vmatpush.bf16.msra.mxu0 %v2353
    %2673 = vmatmul.bf16.gmra.mxu0 %v1732
    %v2674 = vpop.f32.mrf.mxu0
    %v2675 = vadd.f32 %v2661, %v2674
    %v2676 = vpop.f32.mrf.mxu0
    %v2677 = vadd.f32 %v2663, %v2676
    %2678 = vdwg.mxu0
    %2679 = vmatpush.bf16.msra.mxu0 %v2286
    %2680 = vmatpush.bf16.msra.mxu0 %v2282
    %2681 = vmatpush.bf16.msra.mxu0 %v2278
    %2682 = vmatpush.bf16.msra.mxu0 %v2274
    %2683 = vmatpush.bf16.msra.mxu0 %v2270
    %2684 = vmatpush.bf16.msra.mxu0 %v2266
    %2685 = vmatpush.bf16.msra.mxu0 %v2262
    %2686 = vmatpush.bf16.msra.mxu0 %v2258
    %2687 = vmatmul.bf16.gmra.mxu0 %v1729
    %v2688 = vpop.f32.mrf.mxu0
    %v2689 = vadd.f32 %v1866, %v2688
    %v2690 = vpop.f32.mrf.mxu0
    %v2691 = vadd.f32 %v1866, %v2690
    %2692 = vdwg.mxu0
    %2693 = vmatpush.bf16.msra.mxu0 %v2318
    %2694 = vmatpush.bf16.msra.mxu0 %v2314
    %2695 = vmatpush.bf16.msra.mxu0 %v2310
    %2696 = vmatpush.bf16.msra.mxu0 %v2306
    %2697 = vmatpush.bf16.msra.mxu0 %v2302
    %2698 = vmatpush.bf16.msra.mxu0 %v2298
    %2699 = vmatpush.bf16.msra.mxu0 %v2294
    %2700 = vmatpush.bf16.msra.mxu0 %v2290
    %2701 = vmatmul.bf16.gmra.mxu0 %v1730
    %v2702 = vpop.f32.mrf.mxu0
    %v2703 = vadd.f32 %v2689, %v2702
    %v2704 = vpop.f32.mrf.mxu0
    %v2705 = vadd.f32 %v2691, %v2704
    %2706 = vdwg.mxu0
    %2707 = vmatpush.bf16.msra.mxu0 %v2350
    %2708 = vmatpush.bf16.msra.mxu0 %v2346
    %2709 = vmatpush.bf16.msra.mxu0 %v2342
    %2710 = vmatpush.bf16.msra.mxu0 %v2338
    %2711 = vmatpush.bf16.msra.mxu0 %v2334
    %2712 = vmatpush.bf16.msra.mxu0 %v2330
    %2713 = vmatpush.bf16.msra.mxu0 %v2326
    %2714 = vmatpush.bf16.msra.mxu0 %v2322
    %2715 = vmatmul.bf16.gmra.mxu0 %v1731
    %v2716 = vpop.f32.mrf.mxu0
    %v2717 = vadd.f32 %v2703, %v2716
    %v2718 = vpop.f32.mrf.mxu0
    %v2719 = vadd.f32 %v2705, %v2718
    %2720 = vdwg.mxu0
    %2721 = vmatpush.bf16.msra.mxu0 %v2382
    %2722 = vmatpush.bf16.msra.mxu0 %v2378
    %2723 = vmatpush.bf16.msra.mxu0 %v2374
    %2724 = vmatpush.bf16.msra.mxu0 %v2370
    %2725 = vmatpush.bf16.msra.mxu0 %v2366
    %2726 = vmatpush.bf16.msra.mxu0 %v2362
    %2727 = vmatpush.bf16.msra.mxu0 %v2358
    %2728 = vmatpush.bf16.msra.mxu0 %v2354
    %2729 = vmatmul.bf16.gmra.mxu0 %v1732
    %v2730 = vpop.f32.mrf.mxu0
    %v2731 = vadd.f32 %v2717, %v2730
    %v2732 = vpop.f32.mrf.mxu0
    %v2733 = vadd.f32 %v2719, %v2732
    %2734 = vdwg.mxu0
    %v2735 = vmax.f32 %v2563, 0.0
    %v2736 = vmax.f32 %v2619, 0.0
    %v2737 = vmax.f32 %v2675, 0.0
    %v2738 = vmax.f32 %v2731, 0.0
    %v2739 = vmax.f32 %v2565, 0.0
    %v2740 = vmax.f32 %v2621, 0.0
    %v2741 = vmax.f32 %v2677, 0.0
    %v2742 = vmax.f32 %v2733, 0.0
    %v2743 = vpack.c.bf16 %v2739, %v2735
    %v2744 = vpack.c.bf16 %v2740, %v2736
    %v2745 = vpack.c.bf16 %v2741, %v2737
    %v2746 = vpack.c.bf16 %v2742, %v2738
    %v2747 = vld [vmem:[#allocation11] sm:$0xf]
    %v2748 = vld [vmem:[#allocation11 + $0x4] sm:$0xf]
    %v2749 = vld [vmem:[#allocation11 + $0x8] sm:$0xf]
    %v2750 = vld [vmem:[#allocation11 + $0xc] sm:$0xf]
    %v2751 = vld [vmem:[#allocation11 + $0x10] sm:$0xf]
    %v2752 = vld [vmem:[#allocation11 + $0x14] sm:$0xf]
    %v2753 = vld [vmem:[#allocation11 + $0x18] sm:$0xf]
    %v2754 = vld [vmem:[#allocation11 + $0x1c] sm:$0xf]
    %v2755 = vld [vmem:[#allocation11 + $0x20] sm:$0xf]
    %v2756 = vld [vmem:[#allocation11 + $0x24] sm:$0xf]
    %v2757 = vld [vmem:[#allocation11 + $0x28] sm:$0xf]
    %v2758 = vld [vmem:[#allocation11 + $0x2c] sm:$0xf]
    %v2759 = vld [vmem:[#allocation11 + $0x30] sm:$0xf]
    %v2760 = vld [vmem:[#allocation11 + $0x34] sm:$0xf]
    %v2761 = vld [vmem:[#allocation11 + $0x38] sm:$0xf]
    %v2762 = vld [vmem:[#allocation11 + $0x3c] sm:$0xf]
    %v2763 = vld [vmem:[#allocation11 + $0x40] sm:$0xf]
    %v2764 = vld [vmem:[#allocation11 + $0x44] sm:$0xf]
    %v2765 = vld [vmem:[#allocation11 + $0x48] sm:$0xf]
    %v2766 = vld [vmem:[#allocation11 + $0x4c] sm:$0xf]
    %v2767 = vld [vmem:[#allocation11 + $0x50] sm:$0xf]
    %v2768 = vld [vmem:[#allocation11 + $0x54] sm:$0xf]
    %v2769 = vld [vmem:[#allocation11 + $0x58] sm:$0xf]
    %v2770 = vld [vmem:[#allocation11 + $0x5c] sm:$0xf]
    %v2771 = vld [vmem:[#allocation11 + $0x60] sm:$0xf]
    %v2772 = vld [vmem:[#allocation11 + $0x64] sm:$0xf]
    %v2773 = vld [vmem:[#allocation11 + $0x68] sm:$0xf]
    %v2774 = vld [vmem:[#allocation11 + $0x6c] sm:$0xf]
    %v2775 = vld [vmem:[#allocation11 + $0x70] sm:$0xf]
    %v2776 = vld [vmem:[#allocation11 + $0x74] sm:$0xf]
    %v2777 = vld [vmem:[#allocation11 + $0x78] sm:$0xf]
    %v2778 = vld [vmem:[#allocation11 + $0x7c] sm:$0xf]
    %v2779 = vld [vmem:[#allocation11 + $0x80] sm:$0xf]
    %v2780 = vld [vmem:[#allocation11 + $0x84] sm:$0xf]
    %v2781 = vld [vmem:[#allocation11 + $0x88] sm:$0xf]
    %v2782 = vld [vmem:[#allocation11 + $0x8c] sm:$0xf]
    %v2783 = vld [vmem:[#allocation11 + $0x90] sm:$0xf]
    %v2784 = vld [vmem:[#allocation11 + $0x94] sm:$0xf]
    %v2785 = vld [vmem:[#allocation11 + $0x98] sm:$0xf]
    %v2786 = vld [vmem:[#allocation11 + $0x9c] sm:$0xf]
    %v2787 = vld [vmem:[#allocation11 + $0xa0] sm:$0xf]
    %v2788 = vld [vmem:[#allocation11 + $0xa4] sm:$0xf]
    %v2789 = vld [vmem:[#allocation11 + $0xa8] sm:$0xf]
    %v2790 = vld [vmem:[#allocation11 + $0xac] sm:$0xf]
    %v2791 = vld [vmem:[#allocation11 + $0xb0] sm:$0xf]
    %v2792 = vld [vmem:[#allocation11 + $0xb4] sm:$0xf]
    %v2793 = vld [vmem:[#allocation11 + $0xb8] sm:$0xf]
    %v2794 = vld [vmem:[#allocation11 + $0xbc] sm:$0xf]
    %v2795 = vld [vmem:[#allocation11 + $0xc0] sm:$0xf]
    %v2796 = vld [vmem:[#allocation11 + $0xc4] sm:$0xf]
    %v2797 = vld [vmem:[#allocation11 + $0xc8] sm:$0xf]
    %v2798 = vld [vmem:[#allocation11 + $0xcc] sm:$0xf]
    %v2799 = vld [vmem:[#allocation11 + $0xd0] sm:$0xf]
    %v2800 = vld [vmem:[#allocation11 + $0xd4] sm:$0xf]
    %v2801 = vld [vmem:[#allocation11 + $0xd8] sm:$0xf]
    %v2802 = vld [vmem:[#allocation11 + $0xdc] sm:$0xf]
    %v2803 = vld [vmem:[#allocation11 + $0xe0] sm:$0xf]
    %v2804 = vld [vmem:[#allocation11 + $0xe4] sm:$0xf]
    %v2805 = vld [vmem:[#allocation11 + $0xe8] sm:$0xf]
    %v2806 = vld [vmem:[#allocation11 + $0xec] sm:$0xf]
    %v2807 = vld [vmem:[#allocation11 + $0xf0] sm:$0xf]
    %v2808 = vld [vmem:[#allocation11 + $0xf4] sm:$0xf]
    %v2809 = vld [vmem:[#allocation11 + $0xf8] sm:$0xf]
    %v2810 = vld [vmem:[#allocation11 + $0xfc] sm:$0xf]
    %v2811 = vld [vmem:[%s6] sm:$0x1]
    %v2813 = vperm.slane %v2811, 0
    %v2879 = vunpack.c.l.b16 %v2747
    %v2880 = vunpack.c.l.b16 %v2748
    %v2881 = vunpack.c.l.b16 %v2749
    %v2882 = vunpack.c.l.b16 %v2750
    %v2883 = vunpack.c.l.b16 %v2751
    %v2884 = vunpack.c.l.b16 %v2752
    %v2885 = vunpack.c.l.b16 %v2753
    %v2886 = vunpack.c.l.b16 %v2754
    %v2887 = vunpack.c.l.b16 %v2755
    %v2888 = vunpack.c.l.b16 %v2756
    %v2889 = vunpack.c.l.b16 %v2757
    %v2890 = vunpack.c.l.b16 %v2758
    %v2891 = vunpack.c.l.b16 %v2759
    %v2892 = vunpack.c.l.b16 %v2760
    %v2893 = vunpack.c.l.b16 %v2761
    %v2894 = vunpack.c.l.b16 %v2762
    %v2895 = vunpack.c.l.b16 %v2763
    %v2896 = vunpack.c.l.b16 %v2764
    %v2897 = vunpack.c.l.b16 %v2765
    %v2898 = vunpack.c.l.b16 %v2766
    %v2899 = vunpack.c.l.b16 %v2767
    %v2900 = vunpack.c.l.b16 %v2768
    %v2901 = vunpack.c.l.b16 %v2769
    %v2902 = vunpack.c.l.b16 %v2770
    %v2903 = vunpack.c.l.b16 %v2771
    %v2904 = vunpack.c.l.b16 %v2772
    %v2905 = vunpack.c.l.b16 %v2773
    %v2906 = vunpack.c.l.b16 %v2774
    %v2907 = vunpack.c.l.b16 %v2775
    %v2908 = vunpack.c.l.b16 %v2776
    %v2909 = vunpack.c.l.b16 %v2777
    %v2910 = vunpack.c.l.b16 %v2778
    %v2911 = vunpack.c.l.b16 %v2779
    %v2912 = vunpack.c.l.b16 %v2780
    %v2913 = vunpack.c.l.b16 %v2781
    %v2914 = vunpack.c.l.b16 %v2782
    %v2915 = vunpack.c.l.b16 %v2783
    %v2916 = vunpack.c.l.b16 %v2784
    %v2917 = vunpack.c.l.b16 %v2785
    %v2918 = vunpack.c.l.b16 %v2786
    %v2919 = vunpack.c.l.b16 %v2787
    %v2920 = vunpack.c.l.b16 %v2788
    %v2921 = vunpack.c.l.b16 %v2789
    %v2922 = vunpack.c.l.b16 %v2790
    %v2923 = vunpack.c.l.b16 %v2791
    %v2924 = vunpack.c.l.b16 %v2792
    %v2925 = vunpack.c.l.b16 %v2793
    %v2926 = vunpack.c.l.b16 %v2794
    %v2927 = vunpack.c.l.b16 %v2795
    %v2928 = vunpack.c.l.b16 %v2796
    %v2929 = vunpack.c.l.b16 %v2797
    %v2930 = vunpack.c.l.b16 %v2798
    %v2931 = vunpack.c.l.b16 %v2799
    %v2932 = vunpack.c.l.b16 %v2800
    %v2933 = vunpack.c.l.b16 %v2801
    %v2934 = vunpack.c.l.b16 %v2802
    %v2935 = vunpack.c.l.b16 %v2803
    %v2936 = vunpack.c.l.b16 %v2804
    %v2937 = vunpack.c.l.b16 %v2805
    %v2938 = vunpack.c.l.b16 %v2806
    %v2939 = vunpack.c.l.b16 %v2807
    %v2940 = vunpack.c.l.b16 %v2808
    %v2941 = vunpack.c.l.b16 %v2809
    %v2942 = vunpack.c.l.b16 %v2810
    %v2943 = vpack.c.b16 %v2880, %v2879
    %v2944 = vpack.c.b16 %v2882, %v2881
    %v2945 = vpack.c.b16 %v2884, %v2883
    %v2946 = vpack.c.b16 %v2886, %v2885
    %v2947 = vpack.c.b16 %v2888, %v2887
    %v2948 = vpack.c.b16 %v2890, %v2889
    %v2949 = vpack.c.b16 %v2892, %v2891
    %v2950 = vpack.c.b16 %v2894, %v2893
    %v2951 = vpack.c.b16 %v2896, %v2895
    %v2952 = vpack.c.b16 %v2898, %v2897
    %v2953 = vpack.c.b16 %v2900, %v2899
    %v2954 = vpack.c.b16 %v2902, %v2901
    %v2955 = vpack.c.b16 %v2904, %v2903
    %v2956 = vpack.c.b16 %v2906, %v2905
    %v2957 = vpack.c.b16 %v2908, %v2907
    %v2958 = vpack.c.b16 %v2910, %v2909
    %v2959 = vpack.c.b16 %v2912, %v2911
    %v2960 = vpack.c.b16 %v2914, %v2913
    %v2961 = vpack.c.b16 %v2916, %v2915
    %v2962 = vpack.c.b16 %v2918, %v2917
    %v2963 = vpack.c.b16 %v2920, %v2919
    %v2964 = vpack.c.b16 %v2922, %v2921
    %v2965 = vpack.c.b16 %v2924, %v2923
    %v2966 = vpack.c.b16 %v2926, %v2925
    %v2967 = vpack.c.b16 %v2928, %v2927
    %v2968 = vpack.c.b16 %v2930, %v2929
    %v2969 = vpack.c.b16 %v2932, %v2931
    %v2970 = vpack.c.b16 %v2934, %v2933
    %v2971 = vpack.c.b16 %v2936, %v2935
    %v2972 = vpack.c.b16 %v2938, %v2937
    %v2973 = vpack.c.b16 %v2940, %v2939
    %v2974 = vpack.c.b16 %v2942, %v2941
    %3007 = vmatpush.bf16.msra.mxu0 %v2950
    %3008 = vmatpush.bf16.msra.mxu0 %v2949
    %3009 = vmatpush.bf16.msra.mxu0 %v2948
    %3010 = vmatpush.bf16.msra.mxu0 %v2947
    %3011 = vmatpush.bf16.msra.mxu0 %v2946
    %3012 = vmatpush.bf16.msra.mxu0 %v2945
    %3013 = vmatpush.bf16.msra.mxu0 %v2944
    %3014 = vmatpush.bf16.msra.mxu0 %v2943
    %3015 = vmatmul.bf16.gmra.mxu0 %v2743
    %v3016 = vpop.f32.mrf.mxu0
    %v3017 = vadd.f32 %v2813, %v3016
    %v3018 = vpop.f32.mrf.mxu0
    %v3019 = vadd.f32 %v2813, %v3018
    %3020 = vdwg.mxu0
    %3021 = vmatpush.bf16.msra.mxu0 %v2958
    %3022 = vmatpush.bf16.msra.mxu0 %v2957
    %3023 = vmatpush.bf16.msra.mxu0 %v2956
    %3024 = vmatpush.bf16.msra.mxu0 %v2955
    %3025 = vmatpush.bf16.msra.mxu0 %v2954
    %3026 = vmatpush.bf16.msra.mxu0 %v2953
    %3027 = vmatpush.bf16.msra.mxu0 %v2952
    %3028 = vmatpush.bf16.msra.mxu0 %v2951
    %3029 = vmatmul.bf16.gmra.mxu0 %v2744
    %v3030 = vpop.f32.mrf.mxu0
    %v3031 = vadd.f32 %v3017, %v3030
    %v3032 = vpop.f32.mrf.mxu0
    %v3033 = vadd.f32 %v3019, %v3032
    %3034 = vdwg.mxu0
    %3035 = vmatpush.bf16.msra.mxu0 %v2966
    %3036 = vmatpush.bf16.msra.mxu0 %v2965
    %3037 = vmatpush.bf16.msra.mxu0 %v2964
    %3038 = vmatpush.bf16.msra.mxu0 %v2963
    %3039 = vmatpush.bf16.msra.mxu0 %v2962
    %3040 = vmatpush.bf16.msra.mxu0 %v2961
    %3041 = vmatpush.bf16.msra.mxu0 %v2960
    %3042 = vmatpush.bf16.msra.mxu0 %v2959
    %3043 = vmatmul.bf16.gmra.mxu0 %v2745
    %v3044 = vpop.f32.mrf.mxu0
    %v3045 = vadd.f32 %v3031, %v3044
    %v3046 = vpop.f32.mrf.mxu0
    %v3047 = vadd.f32 %v3033, %v3046
    %3048 = vdwg.mxu0
    %3049 = vmatpush.bf16.msra.mxu0 %v2974
    %3050 = vmatpush.bf16.msra.mxu0 %v2973
    %3051 = vmatpush.bf16.msra.mxu0 %v2972
    %3052 = vmatpush.bf16.msra.mxu0 %v2971
    %3053 = vmatpush.bf16.msra.mxu0 %v2970
    %3054 = vmatpush.bf16.msra.mxu0 %v2969
    %3055 = vmatpush.bf16.msra.mxu0 %v2968
    %3056 = vmatpush.bf16.msra.mxu0 %v2967
    %3057 = vmatmul.bf16.gmra.mxu0 %v2746
    %v3058 = vpop.f32.mrf.mxu0
    %v3059 = vadd.f32 %v3045, %v3058
    %v3060 = vpop.f32.mrf.mxu0
    %v3061 = vadd.f32 %v3047, %v3060
    %3062 = vdwg.mxu0
    %3063 = vst [vmem:[#allocation13] sm:$0xff] %v3059
    %3064 = vst [vmem:[#allocation13 + $0x8] sm:$0xff] %v3061
    // Predicated region
    $region54: #{tpu_custom_call.1} parent=1 // pred_check
      _
    $region55: #{tpu_custom_call.1} parent=1 // pred_check_branch
      %3066 = sbr.rel (0) target = $region57
    $region56: #{tpu_custom_call.1} parent=1 // pred_region
      %3068 = vsyncadd [#allocation4], 0
      %s3069 = sshll.u32 [#allocation13], 4
      %s3070 = int_to_ptr.vmem [resolvable:$true] %s3069
      %s3071 = sshll.u32 %s7, 4
      %s3072 = int_to_ptr.hbm [resolvable:$true] %s3071
      %3077 = dma.vmem_to_hbm [thread:$0]  %s3070, 256, %s3072, [#allocation4], 128, 128, 8
    $region57: #{tpu_custom_call.1} parent=1 // pred_fallthru
      _
    // Predicated region
    $region58: #{tpu_custom_call.1} parent=1 // pred_check
      _
    $region59: #{tpu_custom_call.1} parent=1 // pred_check_branch
      %3079 = sbr.rel (0) target = $region61
    $region60: #{tpu_custom_call.1} parent=1 // pred_region
      %3081 = dma.done [#allocation4], 256
    $region61: #{tpu_custom_call.1} parent=1 // pred_fallthru
      _
    %3082 = vsyncpa [#allocation3], 1
    %3083 = vsyncpa [#allocation6], 1
    %3084 = vsyncpa [#allocation9], 1
    %3085 = vsyncpa [#allocation12], 1
    %3086 = vsyncpa [#allocation4], 1

</llo_original>
